<compile_context>
chip_gen: v7x
topology: tpu7x:2x2x1
jax: 0.10.0
libtpu: 0.0.40
codegen_flags: <defaults>
</compile_context>

<pallas_src>
import jax
import jax.numpy as jnp
from jax.experimental import pallas as pl
from jax.experimental.pallas import tpu as pltpu


def _wcompute_kernel(xi_ref, xj_ref, wid_ref, w1_ref, b1_ref,
                     w2_ref, b2_ref, w3_ref, out_ref):
    # xi_ref : (1, TILE_I, F)  rows i of this tile (one batch element)
    # xj_ref : (1, N, F)       all nodes j (same batch element)
    # wid_ref: (1, TILE_I, N)  mask rows
    # w1_ref : (F, C1) bf16, b1_ref: (1, C1) f32
    # w2_ref : (C1, C2) bf16, b2_ref: (1, C2) f32
    # w3_ref : (1, C2) f32     conv_last weight row (bias dropped: softmax shift-inv.)
    # out_ref: (1, TILE_I, N)  softmax(W_new) over j
    xi = xi_ref[0].astype(jnp.float32)                     # (TILE_I, F)
    xj = xj_ref[0].astype(jnp.float32)                     # (N, F)
    ti, f = xi.shape
    n = xj.shape[0]

    # pairwise |xi - xj| edge features; flatten the (i, j) pairs onto sublanes
    # (leading-dim merge only: safe reshape, F stays on lanes).
    d = jnp.abs(xi[:, None, :] - xj[None, :, :])           # (TILE_I, N, F) f32
    d2 = d.reshape(ti * n, f).astype(jnp.bfloat16)         # bf16 MXU operand

    # 1x1 conv #1 + folded BN (bf16 MXU, f32 accumulate) + leaky_relu (f32 VPU)
    h = jnp.dot(d2, w1_ref[...], preferred_element_type=jnp.float32) + b1_ref[...]
    h = jnp.maximum(h, 0.01 * h)
    # 1x1 conv #2 + folded BN + leaky_relu
    h = jnp.dot(h.astype(jnp.bfloat16), w2_ref[...],
                preferred_element_type=jnp.float32) + b2_ref[...]
    h = jnp.maximum(h, 0.01 * h)

    # conv_last (1-wide output): VPU multiply + lane reduce instead of MXU matmul.
    # conv_last's bias is omitted (softmax over j is shift-invariant).
    s = jnp.sum(h * w3_ref[...], axis=-1, keepdims=True)   # (TILE_I*N, 1)
    s = s.reshape(ti, n)                                   # (TILE_I, N)

    # hard-mask W_id edges and softmax over j (full row resident -> exact)
    s = s - wid_ref[0] * 1e8
    s = s - jnp.max(s, axis=1, keepdims=True)
    e = jnp.exp(s)
    out_ref[0] = (e / jnp.sum(e, axis=1, keepdims=True)).astype(out_ref.dtype)


def _choose_tile_i(N, F, C1, C2, budget_bytes=8 * 1024 * 1024):
    """Largest i-row tile (multiple of 8, dividing N) whose in-kernel
    intermediates (lane-padded to 128, f32 + bf16 copies) fit the budget."""
    pad = lambda c: ((c + 127) // 128) * 128
    per_row = 6 * N * (pad(F) + pad(C1) + pad(C2))         # ~1.5x the f32 bytes
    max_rows = max(1, budget_bytes // per_row)
    if N % 8 != 0 or max_rows >= N:
        return N
    tile = min((max_rows // 8) * 8, N)
    tile = max(tile, 8)
    while N % tile != 0:
        tile -= 8
    return tile


def wcompute_pallas(x, w_id, params, tile_i=None,
                    vmem_limit_bytes=32 * 1024 * 1024):
    """x: (B, N, F), w_id: (B, N, N, 1). Returns (B, N, N, 2)."""
    B, N, F = x.shape
    w1, b1, w2, b2, w3 = params
    C1 = w1.shape[1]
    C2 = w2.shape[1]
    wid2d = w_id[..., 0]                                   # (B, N, N)

    if tile_i is None:
        tile_i = _choose_tile_i(N, F, C1, C2)
    if N % tile_i != 0 or not (tile_i % 8 == 0 or tile_i == N):
        raise ValueError(f"tile_i={tile_i} must divide N={N} and be a multiple "
                         f"of 8 (or equal N)")

    # bf16 MXU operands (f32 accumulation requested inside the kernel).
    w1b = w1.astype(jnp.bfloat16)
    w2b = w2.astype(jnp.bfloat16)

    full = lambda shape: pl.BlockSpec(shape, lambda b, it: (0,) * len(shape))

    w_soft = pl.pallas_call(
        _wcompute_kernel,
        out_shape=jax.ShapeDtypeStruct((B, N, N), jnp.float32),
        grid=(B, N // tile_i),
        in_specs=[
            pl.BlockSpec((1, tile_i, F), lambda b, it: (b, it, 0)),   # x rows (i)
            pl.BlockSpec((1, N, F), lambda b, it: (b, 0, 0)),         # x all (j)
            pl.BlockSpec((1, tile_i, N), lambda b, it: (b, it, 0)),   # W_id rows
            full((F, C1)), full((1, C1)),
            full((C1, C2)), full((1, C2)),
            full((1, C2)),
        ],
        out_specs=pl.BlockSpec((1, tile_i, N), lambda b, it: (b, it, 0)),
        compiler_params=pltpu.CompilerParams(
            dimension_semantics=("parallel", "parallel"),
            vmem_limit_bytes=vmem_limit_bytes),
    )(x, x, wid2d, w1b, b1, w2b, b2, w3)

    # operator == 'J2': concat([W_id, W_new], dim=3).
    # TODO(synk): downstream consumers accepting a channel-major (B, 2, N, N)
    # layout could take (w_id, w_soft) directly and skip this extra HBM pass;
    # a last-dim-2 kernel output would force lane-width-2 masked stores, so the
    # concat stays in XLA.
    return jnp.concatenate([w_id, w_soft[..., None]], axis=3)


def fold_bn(w, b, gamma, beta, mean, var, eps=1e-5):
    """Fold eval-mode BatchNorm into a 1x1 conv expressed as (Cin, Cout) matmul.

    w: (Cout, Cin) conv weight, b: (Cout,). Returns (Cin, Cout), (1, Cout)."""
    scale = gamma / jnp.sqrt(var + eps)
    w_f = (w * scale[:, None]).T                           # (Cin, Cout)
    b_f = (b - mean) * scale + beta
    return w_f.astype(jnp.float32), b_f[None, :].astype(jnp.float32)


def reference_jax(x, w_id, params):
    """Pure-JAX reference emulating the kernel's bf16-matmul / f32-accumulate
    numerics (so the comparison tolerance can stay tight)."""
    w1, b1, w2, b2, w3 = params
    w1b = w1.astype(jnp.bfloat16)
    w2b = w2.astype(jnp.bfloat16)
    d = jnp.abs(x[:, :, None, :] - x[:, None, :, :]).astype(jnp.bfloat16)
    h = jnp.einsum('bijf,fc->bijc', d, w1b,
                   preferred_element_type=jnp.float32) + b1[0]
    h = jnp.maximum(h, 0.01 * h)
    h = jnp.einsum('bijc,cd->bijd', h.astype(jnp.bfloat16), w2b,
                   preferred_element_type=jnp.float32) + b2[0]
    h = jnp.maximum(h, 0.01 * h)
    s = jnp.sum(h * w3[0], axis=-1)                        # (B, N, N)
    s = s - w_id[..., 0] * 1e8
    s = s - jnp.max(s, axis=2, keepdims=True)
    e = jnp.exp(s)
    p = e / jnp.sum(e, axis=2, keepdims=True)
    return jnp.concatenate([w_id, p[..., None]], axis=3)


if __name__ == "__main__":
    # Module hyper-params (small, consistent with Wcompute __init__)
    B, N = 2, 16
    input_features = 32          # F
    nf = 16
    ratio = [2, 1]
    C1 = nf * ratio[0]           # 32
    C2 = nf * ratio[1]           # 16

    key = jax.random.PRNGKey(0)
    keys = jax.random.split(key, 12)

    x = jax.random.normal(keys[0], (B, N, input_features), jnp.float32)
    w_id = jnp.broadcast_to(jnp.eye(N, dtype=jnp.float32)[None, :, :, None],
                            (B, N, N, 1))

    # Deterministic parameter init (conv weights as (Cout, Cin) since kernel=1x1)
    wc1 = jax.random.normal(keys[1], (C1, input_features), jnp.float32) * 0.1
    bc1 = jax.random.normal(keys[2], (C1,), jnp.float32) * 0.1
    g1 = 1.0 + 0.1 * jax.random.normal(keys[3], (C1,), jnp.float32)
    be1 = 0.1 * jax.random.normal(keys[4], (C1,), jnp.float32)
    m1 = 0.1 * jax.random.normal(keys[5], (C1,), jnp.float32)
    v1 = 1.0 + 0.1 * jax.random.uniform(keys[6], (C1,), jnp.float32)

    wc2 = jax.random.normal(keys[7], (C2, C1), jnp.float32) * 0.1
    bc2 = jax.random.normal(keys[8], (C2,), jnp.float32) * 0.1
    g2 = jnp.ones((C2,), jnp.float32)
    be2 = jnp.zeros((C2,), jnp.float32)
    m2 = 0.1 * jax.random.normal(keys[9], (C2,), jnp.float32)
    v2 = 1.0 + 0.1 * jax.random.uniform(keys[10], (C2,), jnp.float32)

    wcl = jax.random.normal(keys[11], (1, C2), jnp.float32) * 0.1
    # conv2d_last bias intentionally unused: the softmax over j is shift-invariant,
    # so a uniform logit offset cannot change the output.

    # Fold BN into conv1 / conv2; conv_last has no BN.
    w1f, b1f = fold_bn(wc1, bc1, g1, be1, m1, v1)
    w2f, b2f = fold_bn(wc2, bc2, g2, be2, m2, v2)
    w3row = wcl.astype(jnp.float32)                        # (1, C2)
    params = (w1f, b1f, w2f, b2f, w3row)

    # tile_i=8 -> grid (B, 2): exercises the i-row tiling path in the demo.
    out = wcompute_pallas(x, w_id, params, tile_i=8)
    out = jax.block_until_ready(out)

    ref = reference_jax(x, w_id, params)
    assert out.shape == (B, N, N, 2), out.shape
    assert jnp.allclose(out, ref, atol=1e-4, rtol=1e-4), (
        "mismatch vs JAX reference: max abs err = "
        + str(float(jnp.max(jnp.abs(out - ref)))))

    print("KERNEL_OK")
</pallas_src>

<mosaic_0001>
module attributes {stable_mosaic.version = 11 : i64} {
  func.func @_wcompute_kernel(%arg0: i32, %arg1: i32, %arg2: memref<1x8x32xf32, #tpu.memory_space<vmem>>, %arg3: memref<1x16x32xf32, #tpu.memory_space<vmem>>, %arg4: memref<1x8x16xf32, #tpu.memory_space<vmem>>, %arg5: memref<32x32xbf16, #tpu.memory_space<vmem>>, %arg6: memref<1x32xf32, #tpu.memory_space<vmem>>, %arg7: memref<32x16xbf16, #tpu.memory_space<vmem>>, %arg8: memref<1x16xf32, #tpu.memory_space<vmem>>, %arg9: memref<1x16xf32, #tpu.memory_space<vmem>>, %arg10: memref<1x8x16xf32, #tpu.memory_space<vmem>>) attributes {dimension_semantics = [#tpu.dimension_semantics<parallel>, #tpu.dimension_semantics<parallel>], iteration_bounds = array<i64: 2, 2>, scalar_prefetch = 0 : i64, scratch_operands = 0 : i64, tpu.core_type = #tpu.core_type<tc>, window_params = [{transform_indices = @transform_0, window_bounds = array<i64: 1, 8, 32>}, {transform_indices = @transform_1, window_bounds = array<i64: 1, 16, 32>}, {transform_indices = @transform_2, window_bounds = array<i64: 1, 8, 16>}, {pipeline_mode = #tpu.pipeline_mode<synchronous>, transform_indices = @transform_3, window_bounds = array<i64: 32, 32>}, {pipeline_mode = #tpu.pipeline_mode<synchronous>, transform_indices = @transform_4, window_bounds = array<i64: 1, 32>}, {pipeline_mode = #tpu.pipeline_mode<synchronous>, transform_indices = @transform_5, window_bounds = array<i64: 32, 16>}, {pipeline_mode = #tpu.pipeline_mode<synchronous>, transform_indices = @transform_6, window_bounds = array<i64: 1, 16>}, {pipeline_mode = #tpu.pipeline_mode<synchronous>, transform_indices = @transform_7, window_bounds = array<i64: 1, 16>}, {transform_indices = @transform_8, window_bounds = array<i64: 1, 8, 16>}]} {
    %c0 = arith.constant 0 : index
    %c0_0 = arith.constant 0 : index
    %c0_1 = arith.constant 0 : index
    %0 = vector.load %arg2[%c0, %c0_0, %c0_1] : memref<1x8x32xf32, #tpu.memory_space<vmem>>, vector<1x8x32xf32>
    %1 = vector.shape_cast %0 : vector<1x8x32xf32> to vector<8x32xf32>
    %c0_2 = arith.constant 0 : index
    %c0_3 = arith.constant 0 : index
    %c0_4 = arith.constant 0 : index
    %2 = vector.load %arg3[%c0_2, %c0_3, %c0_4] : memref<1x16x32xf32, #tpu.memory_space<vmem>>, vector<1x16x32xf32>
    %3 = vector.shape_cast %2 : vector<1x16x32xf32> to vector<16x32xf32>
    %4 = vector.shape_cast %1 : vector<8x32xf32> to vector<8x1x32xf32>
    %5 = vector.shape_cast %3 : vector<16x32xf32> to vector<1x16x32xf32>
    %6 = vector.broadcast %4 : vector<8x1x32xf32> to vector<8x16x32xf32>
    %7 = vector.broadcast %5 : vector<1x16x32xf32> to vector<8x16x32xf32>
    %8 = arith.subf %6, %7 : vector<8x16x32xf32>
    %9 = math.absf %8 : vector<8x16x32xf32>
    %10 = vector.shape_cast %9 : vector<8x16x32xf32> to vector<128x32xf32>
    %11 = arith.truncf %10 : vector<128x32xf32> to vector<128x32xbf16>
    %c0_5 = arith.constant 0 : index
    %c0_6 = arith.constant 0 : index
    %12 = vector.load %arg5[%c0_5, %c0_6] : memref<32x32xbf16, #tpu.memory_space<vmem>>, vector<32x32xbf16>
    %cst = arith.constant dense<0.000000e+00> : vector<128x32xf32>
    %13 = tpu.matmul %11, %12, %cst {dimension_numbers = #tpu.dot_dimension_numbers<[1], [0], [0], [1], [0, 0, 1, 1], [], []>} : vector<128x32xbf16>, vector<32x32xbf16>, vector<128x32xf32> -> vector<128x32xf32>
    %c0_7 = arith.constant 0 : index
    %c0_8 = arith.constant 0 : index
    %14 = vector.load %arg6[%c0_7, %c0_8] : memref<1x32xf32, #tpu.memory_space<vmem>>, vector<1x32xf32>
    %15 = vector.broadcast %14 : vector<1x32xf32> to vector<128x32xf32>
    %16 = arith.addf %13, %15 : vector<128x32xf32>
    %cst_9 = arith.constant 0.00999999977 : f32
    %17 = vector.broadcast %cst_9 : f32 to vector<128x32xf32>
    %18 = arith.mulf %17, %16 : vector<128x32xf32>
    %19 = arith.maximumf %16, %18 : vector<128x32xf32>
    %20 = arith.truncf %19 : vector<128x32xf32> to vector<128x32xbf16>
    %c0_10 = arith.constant 0 : index
    %c0_11 = arith.constant 0 : index
    %21 = vector.load %arg7[%c0_10, %c0_11] : memref<32x16xbf16, #tpu.memory_space<vmem>>, vector<32x16xbf16>
    %cst_12 = arith.constant dense<0.000000e+00> : vector<128x16xf32>
    %22 = tpu.matmul %20, %21, %cst_12 {dimension_numbers = #tpu.dot_dimension_numbers<[1], [0], [0], [1], [0, 0, 1, 1], [], []>} : vector<128x32xbf16>, vector<32x16xbf16>, vector<128x16xf32> -> vector<128x16xf32>
    %c0_13 = arith.constant 0 : index
    %c0_14 = arith.constant 0 : index
    %23 = vector.load %arg8[%c0_13, %c0_14] : memref<1x16xf32, #tpu.memory_space<vmem>>, vector<1x16xf32>
    %24 = vector.broadcast %23 : vector<1x16xf32> to vector<128x16xf32>
    %25 = arith.addf %22, %24 : vector<128x16xf32>
    %cst_15 = arith.constant 0.00999999977 : f32
    %26 = vector.broadcast %cst_15 : f32 to vector<128x16xf32>
    %27 = arith.mulf %26, %25 : vector<128x16xf32>
    %28 = arith.maximumf %25, %27 : vector<128x16xf32>
    %c0_16 = arith.constant 0 : index
    %c0_17 = arith.constant 0 : index
    %29 = vector.load %arg9[%c0_16, %c0_17] : memref<1x16xf32, #tpu.memory_space<vmem>>, vector<1x16xf32>
    %30 = vector.broadcast %29 : vector<1x16xf32> to vector<128x16xf32>
    %31 = arith.mulf %28, %30 : vector<128x16xf32>
    %cst_18 = arith.constant dense<0.000000e+00> : vector<128xf32>
    %32 = vector.multi_reduction <add>, %31, %cst_18 [1] : vector<128x16xf32> to vector<128xf32>
    %33 = vector.shape_cast %32 : vector<128xf32> to vector<128x1xf32>
    %34 = vector.shape_cast %33 : vector<128x1xf32> to vector<8x16xf32>
    %c0_19 = arith.constant 0 : index
    %c0_20 = arith.constant 0 : index
    %c0_21 = arith.constant 0 : index
    %35 = vector.load %arg4[%c0_19, %c0_20, %c0_21] : memref<1x8x16xf32, #tpu.memory_space<vmem>>, vector<1x8x16xf32>
    %36 = vector.shape_cast %35 : vector<1x8x16xf32> to vector<8x16xf32>
    %cst_22 = arith.constant 1.000000e+08 : f32
    %37 = vector.broadcast %cst_22 : f32 to vector<8x16xf32>
    %38 = arith.mulf %36, %37 : vector<8x16xf32>
    %39 = arith.subf %34, %38 : vector<8x16xf32>
    %cst_23 = arith.constant dense<0xFF800000> : vector<8xf32>
    %40 = vector.multi_reduction <maximumf>, %39, %cst_23 [1] : vector<8x16xf32> to vector<8xf32>
    %41 = vector.shape_cast %40 : vector<8xf32> to vector<8x1xf32>
    %42 = vector.broadcast %41 : vector<8x1xf32> to vector<8x16xf32>
    %43 = arith.subf %39, %42 : vector<8x16xf32>
    %44 = math.exp %43 : vector<8x16xf32>
    %cst_24 = arith.constant dense<0.000000e+00> : vector<8xf32>
    %45 = vector.multi_reduction <add>, %44, %cst_24 [1] : vector<8x16xf32> to vector<8xf32>
    %46 = vector.shape_cast %45 : vector<8xf32> to vector<8x1xf32>
    %47 = vector.broadcast %46 : vector<8x1xf32> to vector<8x16xf32>
    %48 = arith.divf %44, %47 : vector<8x16xf32>
    %c0_25 = arith.constant 0 : index
    %c0_26 = arith.constant 0 : index
    %c0_27 = arith.constant 0 : index
    %49 = vector.load %arg10[%c0_25, %c0_26, %c0_27] : memref<1x8x16xf32, #tpu.memory_space<vmem>>, vector<1x8x16xf32>
    %50 = vector.shape_cast %49 : vector<1x8x16xf32> to vector<8x16xf32>
    %51 = vector.shape_cast %48 : vector<8x16xf32> to vector<1x8x16xf32>
    tpu.vector_store %arg10[%c0_25, %c0_26, %c0_27], %51 {strides = array<i32>} : memref<1x8x16xf32, #tpu.memory_space<vmem>>, vector<1x8x16xf32>,
    return
  }
  func.func @transform_0(%arg0: i32, %arg1: i32) -> (i32, i32, i32) {
    %c0_i32 = arith.constant 0 : i32
    %c0_i32_0 = arith.constant 0 : i32
    return %arg0, %arg1, %c0_i32 : i32, i32, i32
  }
  func.func @transform_1(%arg0: i32, %arg1: i32) -> (i32, i32, i32) {
    %c0_i32 = arith.constant 0 : i32
    %c0_i32_0 = arith.constant 0 : i32
    %c0_i32_1 = arith.constant 0 : i32
    return %arg0, %c0_i32, %c0_i32_0 : i32, i32, i32
  }
  func.func @transform_2(%arg0: i32, %arg1: i32) -> (i32, i32, i32) {
    %c0_i32 = arith.constant 0 : i32
    %c0_i32_0 = arith.constant 0 : i32
    return %arg0, %arg1, %c0_i32 : i32, i32, i32
  }
  func.func @transform_3(%arg0: i32, %arg1: i32) -> (i32, i32) {
    %c0_i32 = arith.constant 0 : i32
    %c0_i32_0 = arith.constant 0 : i32
    %c0_i32_1 = arith.constant 0 : i32
    return %c0_i32, %c0_i32_0 : i32, i32
  }
  func.func @transform_4(%arg0: i32, %arg1: i32) -> (i32, i32) {
    %c0_i32 = arith.constant 0 : i32
    %c0_i32_0 = arith.constant 0 : i32
    %c0_i32_1 = arith.constant 0 : i32
    return %c0_i32, %c0_i32_0 : i32, i32
  }
  func.func @transform_5(%arg0: i32, %arg1: i32) -> (i32, i32) {
    %c0_i32 = arith.constant 0 : i32
    %c0_i32_0 = arith.constant 0 : i32
    %c0_i32_1 = arith.constant 0 : i32
    return %c0_i32, %c0_i32_0 : i32, i32
  }
  func.func @transform_6(%arg0: i32, %arg1: i32) -> (i32, i32) {
    %c0_i32 = arith.constant 0 : i32
    %c0_i32_0 = arith.constant 0 : i32
    %c0_i32_1 = arith.constant 0 : i32
    return %c0_i32, %c0_i32_0 : i32, i32
  }
  func.func @transform_7(%arg0: i32, %arg1: i32) -> (i32, i32) {
    %c0_i32 = arith.constant 0 : i32
    %c0_i32_0 = arith.constant 0 : i32
    %c0_i32_1 = arith.constant 0 : i32
    return %c0_i32, %c0_i32_0 : i32, i32
  }
  func.func @transform_8(%arg0: i32, %arg1: i32) -> (i32, i32, i32) {
    %c0_i32 = arith.constant 0 : i32
    %c0_i32_0 = arith.constant 0 : i32
    return %arg0, %arg1, %c0_i32 : i32, i32, i32
  }
}

</mosaic_0001>

<llo_original>
// kernel: tpu_custom_call.1
$region0: #{tpu_custom_call.1}
  #allocation0 [shape = 'u32[]', space=smem, size = 0x4, offset = 0x4, fixed_abs, tag = 'smem constant byte address 0x4 - core index']
  #allocation1 [shape = 'u32[144,128]{1,0:T(1,128)}', space=vmem, size = 0x12000, scoped, tag = 'internal scratch']
  %s0 = inlined_call_operand.hbm [shape: f32[2,16,32], index: 0, kind: input, shape index: {}]
  %s1 = inlined_call_operand.hbm [shape: f32[2,16,32], index: 1, kind: input, shape index: {}]
  %s2 = inlined_call_operand.hbm [shape: f32[2,16,16], index: 2, kind: input, shape index: {}]
  %s3 = inlined_call_operand.vmem [shape: bf16[32,32], index: 3, kind: input, shape index: {}]
  %s4 = inlined_call_operand.vmem [shape: f32[1,32], index: 4, kind: input, shape index: {}]
  %s5 = inlined_call_operand.vmem [shape: bf16[32,16], index: 5, kind: input, shape index: {}]
  %s6 = inlined_call_operand.vmem [shape: f32[1,16], index: 6, kind: input, shape index: {}]
  %s7 = inlined_call_operand.vmem [shape: f32[1,16], index: 7, kind: input, shape index: {}]
  %s8 = inlined_call_operand.hbm [shape: f32[2,16,16], index: 8, kind: output, shape index: {}]
  %s9 = sld [smem:[#allocation0]]
  $region77: #{tpu_custom_call.1} parent=0
    _
  %s11 = ssub.s32 1, %s9
  %s12 = scalar_select 0, %s11, %s9
  $region1: #{tpu_custom_call.1} parent=0
    #allocation2 [shape = 'u8[8192]{0}', space=vmem, size = 0x2000, scoped, tag = 'input window, operand 0']
    #allocation3 [shape = 's32[2]{0}', space=sflag, size = 0x8, scoped, tag = 'scoped memory for tpu_custom_call.1']
    #allocation4 [shape = 's32[2]{0}', space=sflag, size = 0x8, scoped, tag = 'scoped memory for tpu_custom_call.1']
    #allocation5 [shape = 'u8[16384]{0}', space=vmem, size = 0x4000, scoped, tag = 'input window, operand 1']
    #allocation6 [shape = 's32[2]{0}', space=sflag, size = 0x8, scoped, tag = 'scoped memory for tpu_custom_call.1']
    #allocation7 [shape = 'u8[8192]{0}', space=vmem, size = 0x2000, scoped, tag = 'input window, operand 2']
    #allocation8 [shape = 'u8[8192]{0}', space=vmem, size = 0x2000, scoped, tag = 'output window, operand 0']
    %13 = vsyncpa [#allocation3], 0
    %s14 = scalar_lea.sflag [#allocation3], 1
    %15 = vsyncpa %s14, 0
    %16 = vsyncpa [#allocation6], 0
    %s17 = scalar_lea.sflag [#allocation6], 1
    %18 = vsyncpa %s17, 0
    %19 = vsyncpa [#allocation4], 0
    %s20 = scalar_lea.sflag [#allocation4], 1
    %21 = vsyncpa %s20, 0
    loop: start=0, step=1, limit=6
    $region2: #{tpu_custom_call.1} parent=1 // loop_pre_header
      _
    $region3: #{tpu_custom_call.1} parent=1 // loop_header
      %s23 = sphi 0, %s27
      %p24 = scmp.ge.s32.totalorder %s23, 6
      %s30 = sphi 0, %s42
      %s31 = sphi 0, %s38
      %s32 = sphi 0, %s30
      %s33 = sphi 0, %s31
      %s34 = sphi 0, %s32
      %s35 = sphi 0, %s33
      %s47 = sphi 0, %s49
      %s50 = sphi 0, %s47
      %s51 = sphi 0, %s50
      %s67 = sphi 0, %s51
      %s73 = sphi 0, %s75
      %s76 = sphi 0, %s73
      %s77 = sphi 0, %s76
      %s93 = sphi 0, %s77
      %s101 = sphi 0, %s103
      %s104 = sphi 0, %s101
      %s105 = sphi 0, %s104
      %s121 = sphi 0, %s105
      %s125 = sphi 0, %s125
      %s127 = sphi 0, %s125
      %s128 = sphi 0, %s127
      %s142 = sphi 0, %s128
      %s146 = sphi 0, %s146
      %s148 = sphi 0, %s146
      %s149 = sphi 0, %s148
      %s163 = sphi 0, %s149
      %s167 = sphi 0, %s167
      %s169 = sphi 0, %s167
      %s170 = sphi 0, %s169
      %s184 = sphi 0, %s170
      %s188 = sphi 0, %s188
      %s190 = sphi 0, %s188
      %s191 = sphi 0, %s190
      %s205 = sphi 0, %s191
      %s209 = sphi 0, %s209
      %s211 = sphi 0, %s209
      %s212 = sphi 0, %s211
      %s226 = sphi 0, %s212
      %s234 = sphi 0, %s236
      %s237 = sphi 0, %s234
      %s238 = sphi 0, %s237
      %s254 = sphi 0, %s238
    $region4: #{tpu_custom_call.1} parent=1 // loop_header_branch
      %26 = sbr.rel (%p24) target = $region8
    $region5: #{tpu_custom_call.1} parent=1 // loop_body
      %s28 = ssub.s32 %s23, 1
      %s29 = ssub.s32 %s23, 2
      %s36 = sadd.s32 1, %s31
      %p37 = scmp.ge.s32.totalorder %s36, 2
      %s38 = scalar_select %p37, 0, %s36
      %s39 = sadd.s32 1, %s30
      %s40 = scalar_select %p37, %s39, %s30
      %p41 = scmp.ge.s32.totalorder %s40, 2
      %s42 = scalar_select %p41, 0, %s40
      %s43 = ssub.s32 %s30, %s42
      %s44 = ssub.s32 %s31, %s38
      %s45 = sor.u32 %s43, %s44
      %p46 = scmp.eq.s32.totalorder %s45, 0
      %s48 = sadd.s32 %s47, 1
      %s49 = scalar_select %p46, %s47, %s48
      %p52 = pneg %p46
      %p53 = scmp.eq.s32.totalorder %s23, 3
      %p54 = por %p52, %p53
      %p55 = scmp.ne.s32.totalorder %s47, %s50
      %p56 = scmp.eq.s32.totalorder %s23, 0
      %p57 = por %p55, %p56
      %p58 = scmp.ne.s32.totalorder %s47, %s50
      %p59 = scmp.eq.s32.totalorder %s28, 3
      %p60 = por %p58, %p59
      %p61 = scmp.ne.s32.totalorder %s50, %s51
      %p62 = scmp.eq.s32.totalorder %s28, 0
      %p63 = por %p61, %p62
      %p64 = scmp.ne.s32.totalorder %s50, %s51
      %p65 = scmp.eq.s32.totalorder %s29, 3
      %p66 = por %p64, %p65
      %p68 = scmp.ne.s32.totalorder %s51, %s67
      %p69 = scmp.eq.s32.totalorder %s29, 0
      %p70 = por %p68, %p69
      %s71 = ssub.s32 %s30, %s42
      %p72 = scmp.eq.s32.totalorder %s71, 0
      %s74 = sadd.s32 %s73, 1
      %s75 = scalar_select %p72, %s73, %s74
      %p78 = pneg %p72
      %p79 = scmp.eq.s32.totalorder %s23, 3
      %p80 = por %p78, %p79
      %p81 = scmp.ne.s32.totalorder %s73, %s76
      %p82 = scmp.eq.s32.totalorder %s23, 0
      %p83 = por %p81, %p82
      %p84 = scmp.ne.s32.totalorder %s73, %s76
      %p85 = scmp.eq.s32.totalorder %s28, 3
      %p86 = por %p84, %p85
      %p87 = scmp.ne.s32.totalorder %s76, %s77
      %p88 = scmp.eq.s32.totalorder %s28, 0
      %p89 = por %p87, %p88
      %p90 = scmp.ne.s32.totalorder %s76, %s77
      %p91 = scmp.eq.s32.totalorder %s29, 3
      %p92 = por %p90, %p91
      %p94 = scmp.ne.s32.totalorder %s77, %s93
      %p95 = scmp.eq.s32.totalorder %s29, 0
      %p96 = por %p94, %p95
      %s97 = ssub.s32 %s30, %s42
      %s98 = ssub.s32 %s31, %s38
      %s99 = sor.u32 %s97, %s98
      %p100 = scmp.eq.s32.totalorder %s99, 0
      %s102 = sadd.s32 %s101, 1
      %s103 = scalar_select %p100, %s101, %s102
      %p106 = pneg %p100
      %p107 = scmp.eq.s32.totalorder %s23, 3
      %p108 = por %p106, %p107
      %p109 = scmp.ne.s32.totalorder %s101, %s104
      %p110 = scmp.eq.s32.totalorder %s23, 0
      %p111 = por %p109, %p110
      %p112 = scmp.ne.s32.totalorder %s101, %s104
      %p113 = scmp.eq.s32.totalorder %s28, 3
      %p114 = por %p112, %p113
      %p115 = scmp.ne.s32.totalorder %s104, %s105
      %p116 = scmp.eq.s32.totalorder %s28, 0
      %p117 = por %p115, %p116
      %p118 = scmp.ne.s32.totalorder %s104, %s105
      %p119 = scmp.eq.s32.totalorder %s29, 3
      %p120 = por %p118, %p119
      %p122 = scmp.ne.s32.totalorder %s105, %s121
      %p123 = scmp.eq.s32.totalorder %s29, 0
      %p124 = por %p122, %p123
      %s126 = sadd.s32 %s125, 1
      %p129 = scmp.eq.s32.totalorder %s23, 3
      %p130 = scmp.ne.s32.totalorder %s125, %s127
      %p131 = scmp.eq.s32.totalorder %s23, 0
      %p132 = por %p130, %p131
      %p133 = scmp.ne.s32.totalorder %s125, %s127
      %p134 = scmp.eq.s32.totalorder %s28, 3
      %p135 = por %p133, %p134
      %p136 = scmp.ne.s32.totalorder %s127, %s128
      %p137 = scmp.eq.s32.totalorder %s28, 0
      %p138 = por %p136, %p137
      %p139 = scmp.ne.s32.totalorder %s127, %s128
      %p140 = scmp.eq.s32.totalorder %s29, 3
      %p141 = por %p139, %p140
      %p143 = scmp.ne.s32.totalorder %s128, %s142
      %p144 = scmp.eq.s32.totalorder %s29, 0
      %p145 = por %p143, %p144
      %s147 = sadd.s32 %s146, 1
      %p150 = scmp.eq.s32.totalorder %s23, 3
      %p151 = scmp.ne.s32.totalorder %s146, %s148
      %p152 = scmp.eq.s32.totalorder %s23, 0
      %p153 = por %p151, %p152
      %p154 = scmp.ne.s32.totalorder %s146, %s148
      %p155 = scmp.eq.s32.totalorder %s28, 3
      %p156 = por %p154, %p155
      %p157 = scmp.ne.s32.totalorder %s148, %s149
      %p158 = scmp.eq.s32.totalorder %s28, 0
      %p159 = por %p157, %p158
      %p160 = scmp.ne.s32.totalorder %s148, %s149
      %p161 = scmp.eq.s32.totalorder %s29, 3
      %p162 = por %p160, %p161
      %p164 = scmp.ne.s32.totalorder %s149, %s163
      %p165 = scmp.eq.s32.totalorder %s29, 0
      %p166 = por %p164, %p165
      %s168 = sadd.s32 %s167, 1
      %p171 = scmp.eq.s32.totalorder %s23, 3
      %p172 = scmp.ne.s32.totalorder %s167, %s169
      %p173 = scmp.eq.s32.totalorder %s23, 0
      %p174 = por %p172, %p173
      %p175 = scmp.ne.s32.totalorder %s167, %s169
      %p176 = scmp.eq.s32.totalorder %s28, 3
      %p177 = por %p175, %p176
      %p178 = scmp.ne.s32.totalorder %s169, %s170
      %p179 = scmp.eq.s32.totalorder %s28, 0
      %p180 = por %p178, %p179
      %p181 = scmp.ne.s32.totalorder %s169, %s170
      %p182 = scmp.eq.s32.totalorder %s29, 3
      %p183 = por %p181, %p182
      %p185 = scmp.ne.s32.totalorder %s170, %s184
      %p186 = scmp.eq.s32.totalorder %s29, 0
      %p187 = por %p185, %p186
      %s189 = sadd.s32 %s188, 1
      %p192 = scmp.eq.s32.totalorder %s23, 3
      %p193 = scmp.ne.s32.totalorder %s188, %s190
      %p194 = scmp.eq.s32.totalorder %s23, 0
      %p195 = por %p193, %p194
      %p196 = scmp.ne.s32.totalorder %s188, %s190
      %p197 = scmp.eq.s32.totalorder %s28, 3
      %p198 = por %p196, %p197
      %p199 = scmp.ne.s32.totalorder %s190, %s191
      %p200 = scmp.eq.s32.totalorder %s28, 0
      %p201 = por %p199, %p200
      %p202 = scmp.ne.s32.totalorder %s190, %s191
      %p203 = scmp.eq.s32.totalorder %s29, 3
      %p204 = por %p202, %p203
      %p206 = scmp.ne.s32.totalorder %s191, %s205
      %p207 = scmp.eq.s32.totalorder %s29, 0
      %p208 = por %p206, %p207
      %s210 = sadd.s32 %s209, 1
      %p213 = scmp.eq.s32.totalorder %s23, 3
      %p214 = scmp.ne.s32.totalorder %s209, %s211
      %p215 = scmp.eq.s32.totalorder %s23, 0
      %p216 = por %p214, %p215
      %p217 = scmp.ne.s32.totalorder %s209, %s211
      %p218 = scmp.eq.s32.totalorder %s28, 3
      %p219 = por %p217, %p218
      %p220 = scmp.ne.s32.totalorder %s211, %s212
      %p221 = scmp.eq.s32.totalorder %s28, 0
      %p222 = por %p220, %p221
      %p223 = scmp.ne.s32.totalorder %s211, %s212
      %p224 = scmp.eq.s32.totalorder %s29, 3
      %p225 = por %p223, %p224
      %p227 = scmp.ne.s32.totalorder %s212, %s226
      %p228 = scmp.eq.s32.totalorder %s29, 0
      %p229 = por %p227, %p228
      %s230 = ssub.s32 %s30, %s42
      %s231 = ssub.s32 %s31, %s38
      %s232 = sor.u32 %s230, %s231
      %p233 = scmp.eq.s32.totalorder %s232, 0
      %s235 = sadd.s32 %s234, 1
      %s236 = scalar_select %p233, %s234, %s235
      %p239 = pneg %p233
      %p240 = scmp.eq.s32.totalorder %s23, 3
      %p241 = por %p239, %p240
      %p242 = scmp.ne.s32.totalorder %s234, %s237
      %p243 = scmp.eq.s32.totalorder %s23, 0
      %p244 = por %p242, %p243
      %p245 = scmp.ne.s32.totalorder %s234, %s237
      %p246 = scmp.eq.s32.totalorder %s28, 3
      %p247 = por %p245, %p246
      %p248 = scmp.ne.s32.totalorder %s237, %s238
      %p249 = scmp.eq.s32.totalorder %s28, 0
      %p250 = por %p248, %p249
      %p251 = scmp.ne.s32.totalorder %s237, %s238
      %p252 = scmp.eq.s32.totalorder %s29, 3
      %p253 = por %p251, %p252
      %p255 = scmp.ne.s32.totalorder %s238, %s254
      %p256 = scmp.eq.s32.totalorder %s29, 0
      %p257 = por %p255, %p256
      %p258 = scmp.le.s32.totalorder 1, %s23
      %p259 = scmp.lt.s32.totalorder %s23, 5
      %p260 = pnand %p258, %p259
      %p261 = pneg %p260
      // Predicated region
      $region9: #{tpu_custom_call.1} parent=5 // pred_check
        _
      $region10: #{tpu_custom_call.1} parent=5 // pred_check_branch
        %263 = sbr.rel (%p260) target = $region12
      $region11: #{tpu_custom_call.1} parent=5 // pred_region
        %s264 = ssub.s32 %s23, 1
        // Predicated region
        $region13: #{tpu_custom_call.1} parent=11 // pred_check
          %p265 = pneg %p138
        $region14: #{tpu_custom_call.1} parent=11 // pred_check_branch
          %267 = sbr.rel (%p265) target = $region16
        $region15: #{tpu_custom_call.1} parent=11 // pred_region
          _
        $region16: #{tpu_custom_call.1} parent=11 // pred_fallthru
          _
        // Predicated region
        $region17: #{tpu_custom_call.1} parent=11 // pred_check
          %p268 = pneg %p159
        $region18: #{tpu_custom_call.1} parent=11 // pred_check_branch
          %270 = sbr.rel (%p268) target = $region20
        $region19: #{tpu_custom_call.1} parent=11 // pred_region
          _
        $region20: #{tpu_custom_call.1} parent=11 // pred_fallthru
          _
        // Predicated region
        $region21: #{tpu_custom_call.1} parent=11 // pred_check
          %p271 = pneg %p180
        $region22: #{tpu_custom_call.1} parent=11 // pred_check_branch
          %273 = sbr.rel (%p271) target = $region24
        $region23: #{tpu_custom_call.1} parent=11 // pred_region
          _
        $region24: #{tpu_custom_call.1} parent=11 // pred_fallthru
          _
        // Predicated region
        $region25: #{tpu_custom_call.1} parent=11 // pred_check
          %p274 = pneg %p201
        $region26: #{tpu_custom_call.1} parent=11 // pred_check_branch
          %276 = sbr.rel (%p274) target = $region28
        $region27: #{tpu_custom_call.1} parent=11 // pred_region
          _
        $region28: #{tpu_custom_call.1} parent=11 // pred_fallthru
          _
        // Predicated region
        $region29: #{tpu_custom_call.1} parent=11 // pred_check
          %p277 = pneg %p222
        $region30: #{tpu_custom_call.1} parent=11 // pred_check_branch
          %279 = sbr.rel (%p277) target = $region32
        $region31: #{tpu_custom_call.1} parent=11 // pred_region
          _
        $region32: #{tpu_custom_call.1} parent=11 // pred_fallthru
          _
      $region12: #{tpu_custom_call.1} parent=5 // pred_fallthru
        _
      %p280 = scmp.lt.s32.totalorder %s23, 4
      // Predicated region
      $region33: #{tpu_custom_call.1} parent=5 // pred_check
        %p281 = pneg %p280
      $region34: #{tpu_custom_call.1} parent=5 // pred_check_branch
        %283 = sbr.rel (%p281) target = $region36
      $region35: #{tpu_custom_call.1} parent=5 // pred_region
        // Predicated region
        $region37: #{tpu_custom_call.1} parent=35 // pred_check
          %p284 = pneg %p57
        $region38: #{tpu_custom_call.1} parent=35 // pred_check_branch
          %286 = sbr.rel (%p284) target = $region40
        $region39: #{tpu_custom_call.1} parent=35 // pred_region
          %s287 = sand.u32 %s47, 1
          %s288 = scalar_lea.sflag [#allocation3], %s287
          %s289 = sand.u32 %s47, 1
          %s290 = smul.addr %s289, 8
          %s291 = scalar_lea.vmem [#allocation2], %s290
          %s293 = ssub.s32 128, 128
          %294 = vsyncadd %s288, %s293
          %s295 = smul.addr %s30, 2
          %s296 = sadd.s32 %s31, %s295
          %s297 = smul.addr %s296, 128
          %s298 = scalar_lea.hbm %s0, %s297
          %s300 = sshll.u32 %s291, 4
          %s301 = int_to_ptr.vmem [resolvable:$true] %s300
          %303 = dma.hbm_to_vmem [thread:$0]  %s298, 128, %s301, %s288
        $region40: #{tpu_custom_call.1} parent=35 // pred_fallthru
          _
        // Predicated region
        $region41: #{tpu_custom_call.1} parent=35 // pred_check
          %p304 = pneg %p83
        $region42: #{tpu_custom_call.1} parent=35 // pred_check_branch
          %306 = sbr.rel (%p304) target = $region44
        $region43: #{tpu_custom_call.1} parent=35 // pred_region
          %s307 = sand.u32 %s23, 1
          %s308 = scalar_lea.sflag [#allocation6], %s307
          %s309 = sand.u32 %s73, 1
          %s310 = smul.addr %s309, 16
          %s311 = scalar_lea.vmem [#allocation5], %s310
          %s313 = ssub.s32 256, 256
          %314 = vsyncadd %s308, %s313
          %s315 = smul.addr %s30, 2
          %s316 = smul.addr %s315, 128
          %s317 = scalar_lea.hbm %s1, %s316
          %s318 = sshll.u32 %s311, 4
          %s319 = int_to_ptr.vmem [resolvable:$true] %s318
          %324 = dma.hbm_to_vmem [thread:$0]  %s317, 256, %s319, %s308, 128, 128, 8
        $region44: #{tpu_custom_call.1} parent=35 // pred_fallthru
          _
        // Predicated region
        $region45: #{tpu_custom_call.1} parent=35 // pred_check
          %p325 = pneg %p111
        $region46: #{tpu_custom_call.1} parent=35 // pred_check_branch
          %327 = sbr.rel (%p325) target = $region48
        $region47: #{tpu_custom_call.1} parent=35 // pred_region
          %s328 = sand.u32 %s23, 1
          %s329 = scalar_lea.sflag [#allocation6], %s328
          %s330 = sand.u32 %s101, 1
          %s331 = smul.addr %s330, 8
          %s332 = scalar_lea.vmem [#allocation7], %s331
          %s334 = ssub.s32 128, 128
          %335 = vsyncadd %s329, %s334
          %s336 = smul.addr %s30, 2
          %s337 = sadd.s32 %s31, %s336
          %s338 = smul.addr %s337, 128
          %s339 = scalar_lea.hbm %s2, %s338
          %s341 = sshll.u32 %s332, 4
          %s342 = int_to_ptr.vmem [resolvable:$true] %s341
          %344 = dma.hbm_to_vmem [thread:$0]  %s339, 128, %s342, %s329
        $region48: #{tpu_custom_call.1} parent=35 // pred_fallthru
          _
      $region36: #{tpu_custom_call.1} parent=5 // pred_fallthru
        _
      %p345 = scmp.le.s32.totalorder 1, %s23
      %p346 = scmp.lt.s32.totalorder %s23, 5
      %p347 = pnand %p345, %p346
      %p348 = pneg %p347
      // Predicated region
      $region49: #{tpu_custom_call.1} parent=5 // pred_check
        _
      $region50: #{tpu_custom_call.1} parent=5 // pred_check_branch
        %350 = sbr.rel (%p347) target = $region52
      $region51: #{tpu_custom_call.1} parent=5 // pred_region
        %s351 = ssub.s32 %s23, 1
        %s352 = sand.u32 %s50, 1
        %s353 = scalar_lea.sflag [#allocation3], %s352
        %s354 = sand.u32 %s50, 1
        %s355 = smul.addr %s354, 8
        %s356 = scalar_lea.vmem [#allocation2], %s355
        // Predicated region
        $region53: #{tpu_custom_call.1} parent=51 // pred_check
          %p357 = pneg %p63
        $region54: #{tpu_custom_call.1} parent=51 // pred_check_branch
          %359 = sbr.rel (%p357) target = $region56
        $region55: #{tpu_custom_call.1} parent=51 // pred_region
          %360 = dma.done %s353, 128
        $region56: #{tpu_custom_call.1} parent=51 // pred_fallthru
          _
        %s361 = sand.u32 %s28, 1
        %s362 = scalar_lea.sflag [#allocation6], %s361
        %s363 = sand.u32 %s76, 1
        %s364 = smul.addr %s363, 16
        %s365 = scalar_lea.vmem [#allocation5], %s364
        // Predicated region
        $region57: #{tpu_custom_call.1} parent=51 // pred_check
          %p366 = pneg %p89
        $region58: #{tpu_custom_call.1} parent=51 // pred_check_branch
          %368 = sbr.rel (%p366) target = $region60
        $region59: #{tpu_custom_call.1} parent=51 // pred_region
          %369 = dma.done %s362, 256
        $region60: #{tpu_custom_call.1} parent=51 // pred_fallthru
          _
        %s370 = sand.u32 %s28, 1
        %s371 = scalar_lea.sflag [#allocation6], %s370
        %s372 = sand.u32 %s104, 1
        %s373 = smul.addr %s372, 8
        %s374 = scalar_lea.vmem [#allocation7], %s373
        // Predicated region
        $region61: #{tpu_custom_call.1} parent=51 // pred_check
          %p375 = pneg %p117
        $region62: #{tpu_custom_call.1} parent=51 // pred_check_branch
          %377 = sbr.rel (%p375) target = $region64
        $region63: #{tpu_custom_call.1} parent=51 // pred_region
          %378 = dma.done %s371, 128
        $region64: #{tpu_custom_call.1} parent=51 // pred_fallthru
          _
        %s379 = sand.u32 %s50, 1
        %s380 = scalar_lea.sflag [#allocation3], %s379
        %s381 = sand.u32 %s50, 1
        %s382 = smul.addr %s381, 8
        %s383 = scalar_lea.vmem [#allocation2], %s382
        %p384 = pneg %p63
        %p385 = pneg %p60
        %s386 = sand.u32 %s28, 1
        %s387 = scalar_lea.sflag [#allocation6], %s386
        %s388 = sand.u32 %s76, 1
        %s389 = smul.addr %s388, 16
        %s390 = scalar_lea.vmem [#allocation5], %s389
        %p391 = pneg %p89
        %p392 = pneg %p86
        %s393 = sand.u32 %s28, 1
        %s394 = scalar_lea.sflag [#allocation6], %s393
        %s395 = sand.u32 %s104, 1
        %s396 = smul.addr %s395, 8
        %s397 = scalar_lea.vmem [#allocation7], %s396
        %p398 = pneg %p117
        %p399 = pneg %p114
        %p400 = pneg %p138
        %p401 = pneg %p135
        %p402 = pneg %p159
        %p403 = pneg %p156
        %p404 = pneg %p180
        %p405 = pneg %p177
        %p406 = pneg %p201
        %p407 = pneg %p198
        %p408 = pneg %p222
        %p409 = pneg %p219
        %p410 = pneg %p250
        %p411 = pneg %p247
        %s412 = sand.u32 %s237, 1
        %s413 = scalar_lea.sflag [#allocation4], %s412
        %s414 = sand.u32 %s237, 1
        %s415 = smul.addr %s414, 8
        %s416 = scalar_lea.vmem [#allocation8], %s415
        %v418 = vld [vmem:[%s356] sm:$0xff]
        %v419 = vld [vmem:[%s365] sm:$0xff]
        %v420 = vld [vmem:[%s365 + $0x8] sm:$0xff]
        %v422 = vcombine.high %v418, %v418
        %v424 = vunpack.c.l.s4 1966171168
        %v425 = vunpack.c.0.s8 %v424
        %v426 = vlaneseq
        %v427 = vshrl.u32 %v426, 7
        %v428 = vsub.s32 %v425, %v427
        %v429 = vrot.slane %v418, %v428
        %v431 = vunpack.c.l.s4 1966171168
        %v432 = vunpack.c.0.s8 %v431
        %v433 = vlaneseq
        %v434 = vshrl.u32 %v433, 7
        %v435 = vsub.s32 %v432, %v434
        %v436 = vrot.slane %v422, %v435
        %v437 = vcombine.high %v429, %v429
        %v438 = vcombine.high %v436, %v436
        %v440 = vunpack.c.l.s4 1966171168
        %v441 = vunpack.c.0.s8 %v440
        %v442 = vlaneseq
        %v443 = vshrl.u32 %v442, 7
        %v444 = vsub.s32 %v441, %v443
        %v445 = vrot.slane %v429, %v444
        %v447 = vunpack.c.l.s4 1966171168
        %v448 = vunpack.c.0.s8 %v447
        %v449 = vlaneseq
        %v450 = vshrl.u32 %v449, 7
        %v451 = vsub.s32 %v448, %v450
        %v452 = vrot.slane %v436, %v451
        %v454 = vunpack.c.l.s4 1966171168
        %v455 = vunpack.c.0.s8 %v454
        %v456 = vlaneseq
        %v457 = vshrl.u32 %v456, 7
        %v458 = vsub.s32 %v455, %v457
        %v459 = vrot.slane %v437, %v458
        %v461 = vunpack.c.l.s4 1966171168
        %v462 = vunpack.c.0.s8 %v461
        %v463 = vlaneseq
        %v464 = vshrl.u32 %v463, 7
        %v465 = vsub.s32 %v462, %v464
        %v466 = vrot.slane %v438, %v465
        %v467 = vcombine.high %v445, %v445
        %v468 = vcombine.high %v452, %v452
        %v469 = vcombine.high %v459, %v459
        %v470 = vcombine.high %v466, %v466
        %v471 = vlaneseq
        %v472 = vshrl.u32 %v471, 7
        %v473 = vsub.s32 0, %v472
        %v474 = vrot.slane %v445, %v473
        %v475 = vlaneseq
        %v476 = vshrl.u32 %v475, 7
        %v477 = vsub.s32 0, %v476
        %v478 = vrot.slane %v459, %v477
        %v479 = vlaneseq
        %v480 = vshrl.u32 %v479, 7
        %v481 = vsub.s32 0, %v480
        %v482 = vrot.slane %v467, %v481
        %v483 = vlaneseq
        %v484 = vshrl.u32 %v483, 7
        %v485 = vsub.s32 0, %v484
        %v486 = vrot.slane %v469, %v485
        %v487 = vlaneseq
        %v488 = vshrl.u32 %v487, 7
        %v489 = vsub.s32 0, %v488
        %v490 = vrot.slane %v452, %v489
        %v491 = vlaneseq
        %v492 = vshrl.u32 %v491, 7
        %v493 = vsub.s32 0, %v492
        %v494 = vrot.slane %v466, %v493
        %v495 = vlaneseq
        %v496 = vshrl.u32 %v495, 7
        %v497 = vsub.s32 0, %v496
        %v498 = vrot.slane %v468, %v497
        %v499 = vlaneseq
        %v500 = vshrl.u32 %v499, 7
        %v501 = vsub.s32 0, %v500
        %v502 = vrot.slane %v470, %v501
        %v511 = vsub.f32 %v474, %v419
        %v512 = vsub.f32 %v474, %v420
        %v513 = vsub.f32 %v478, %v419
        %v514 = vsub.f32 %v478, %v420
        %v515 = vsub.f32 %v482, %v419
        %v516 = vsub.f32 %v482, %v420
        %v517 = vsub.f32 %v486, %v419
        %v518 = vsub.f32 %v486, %v420
        %v519 = vsub.f32 %v490, %v419
        %v520 = vsub.f32 %v490, %v420
        %v521 = vsub.f32 %v494, %v419
        %v522 = vsub.f32 %v494, %v420
        %v523 = vsub.f32 %v498, %v419
        %v524 = vsub.f32 %v498, %v420
        %v525 = vsub.f32 %v502, %v419
        %v526 = vsub.f32 %v502, %v420
        %v527 = vand.u32 2147483647, %v511
        %v528 = vand.u32 2147483647, %v512
        %v529 = vand.u32 2147483647, %v513
        %v530 = vand.u32 2147483647, %v514
        %v531 = vand.u32 2147483647, %v515
        %v532 = vand.u32 2147483647, %v516
        %v533 = vand.u32 2147483647, %v517
        %v534 = vand.u32 2147483647, %v518
        %v535 = vand.u32 2147483647, %v519
        %v536 = vand.u32 2147483647, %v520
        %v537 = vand.u32 2147483647, %v521
        %v538 = vand.u32 2147483647, %v522
        %v539 = vand.u32 2147483647, %v523
        %v540 = vand.u32 2147483647, %v524
        %v541 = vand.u32 2147483647, %v525
        %v542 = vand.u32 2147483647, %v526
        %v543 = vpack.c.bf16 %v528, %v527
        %v544 = vpack.c.bf16 %v530, %v529
        %v545 = vpack.c.bf16 %v532, %v531
        %v546 = vpack.c.bf16 %v534, %v533
        %v547 = vpack.c.bf16 %v536, %v535
        %v548 = vpack.c.bf16 %v538, %v537
        %v549 = vpack.c.bf16 %v540, %v539
        %v550 = vpack.c.bf16 %v542, %v541
        %v551 = vld [vmem:[%s3] sm:$0xf]
        %v552 = vld [vmem:[%s3 + $0x4] sm:$0xf]
        %v553 = vld [vmem:[%s3 + $0x8] sm:$0xf]
        %v554 = vld [vmem:[%s3 + $0xc] sm:$0xf]
        %v555 = vld [vmem:[%s4] sm:$0x1]
        %v557 = vlaneseq
        %v558 = vshrl.u32 %v557, 7
        %v559 = vsub.s32 0, %v558
        %v560 = vrot.slane %v555, %v559
        %v566 = vunpack.c.l.b16 %v551
        %v567 = vunpack.c.l.b16 %v552
        %v568 = vunpack.c.l.b16 %v553
        %v569 = vunpack.c.l.b16 %v554
        %v570 = vpack.c.b16 %v567, %v566
        %v571 = vpack.c.b16 %v569, %v568
        %vm574 = vcmask 261120
        %v576 = vsel %vm574, %v543, 0
        %v579 = vsel %vm574, %v544, 0
        %v582 = vsel %vm574, %v545, 0
        %v585 = vsel %vm574, %v546, 0
        %v588 = vsel %vm574, %v547, 0
        %v591 = vsel %vm574, %v548, 0
        %v594 = vsel %vm574, %v549, 0
        %v597 = vsel %vm574, %v550, 0
        %599 = vmatprep.subr.bf16.mxu0 0
        %600 = vmatpush1.bf16.msra.mxu0 %v570
        %601 = vmatprep.subr.bf16.mxu0 0
        %602 = vmatpush1.bf16.msra.mxu0 %v571
        %603 = vmatprep.subr.bf16.mxu0 0
        %604 = vmatpush1.bf16.msra.mxu0 0
        %605 = vmatprep.subr.bf16.mxu0 0
        %606 = vmatpush1.bf16.msra.mxu0 0
        %607 = vmatprep.subr.bf16.mxu0 0
        %608 = vmatpush1.bf16.msra.mxu0 0
        %609 = vmatprep.subr.bf16.mxu0 0
        %610 = vmatpush1.bf16.msra.mxu0 0
        %611 = vmatprep.subr.bf16.mxu0 0
        %612 = vmatpush1.bf16.msra.mxu0 0
        %613 = vmatprep.subr.bf16.mxu0 0
        %614 = vmatpush1.bf16.msra.mxu0 0
        %615 = vmatprep.subr.bf16.mxu0 0
        %616 = vmatpush1.bf16.msra.mxu0 0
        %617 = vmatprep.subr.bf16.mxu0 0
        %618 = vmatpush1.bf16.msra.mxu0 0
        %619 = vmatprep.subr.bf16.mxu0 0
        %620 = vmatpush1.bf16.msra.mxu0 0
        %621 = vmatprep.subr.bf16.mxu0 0
        %622 = vmatpush1.bf16.msra.mxu0 0
        %623 = vmatprep.subr.bf16.mxu0 0
        %624 = vmatpush1.bf16.msra.mxu0 0
        %625 = vmatprep.subr.bf16.mxu0 0
        %626 = vmatpush1.bf16.msra.mxu0 0
        %627 = vmatprep.subr.bf16.mxu0 0
        %628 = vmatpush1.bf16.msra.mxu0 0
        %629 = vmatprep.subr.bf16.mxu0 0
        %630 = vmatpush1.bf16.msra.mxu0 0
        %631 = vmatprep.mubr.bf16.mxu0 0
        %632 = vmatmul.mubr.bf16.gmra.mrb[0].mxu0 %v576
        %v633 = vpop.f32.mrb[0].mxu0
        %v634 = vadd.f32 %v560, %v633
        %v635 = vpop.f32.mrb[0].mxu0
        %v636 = vpop.f32.mrb[0].mxu0
        %v637 = vadd.f32 %v560, %v636
        %v638 = vpop.f32.mrb[0].mxu0
        %639 = vmatprep.mubr.bf16.mxu0 0
        %640 = vmatmul.mubr.bf16.gmra.mrb[0].mxu0 %v579
        %v641 = vpop.f32.mrb[0].mxu0
        %v642 = vadd.f32 %v560, %v641
        %v643 = vpop.f32.mrb[0].mxu0
        %v644 = vpop.f32.mrb[0].mxu0
        %v645 = vadd.f32 %v560, %v644
        %v646 = vpop.f32.mrb[0].mxu0
        %647 = vmatprep.mubr.bf16.mxu0 0
        %648 = vmatmul.mubr.bf16.gmra.mrb[0].mxu0 %v582
        %v649 = vpop.f32.mrb[0].mxu0
        %v650 = vadd.f32 %v560, %v649
        %v651 = vpop.f32.mrb[0].mxu0
        %v652 = vpop.f32.mrb[0].mxu0
        %v653 = vadd.f32 %v560, %v652
        %v654 = vpop.f32.mrb[0].mxu0
        %655 = vmatprep.mubr.bf16.mxu0 0
        %656 = vmatmul.mubr.bf16.gmra.mrb[0].mxu0 %v585
        %v657 = vpop.f32.mrb[0].mxu0
        %v658 = vadd.f32 %v560, %v657
        %v659 = vpop.f32.mrb[0].mxu0
        %v660 = vpop.f32.mrb[0].mxu0
        %v661 = vadd.f32 %v560, %v660
        %v662 = vpop.f32.mrb[0].mxu0
        %663 = vmatprep.mubr.bf16.mxu0 0
        %664 = vmatmul.mubr.bf16.gmra.mrb[0].mxu0 %v588
        %v665 = vpop.f32.mrb[0].mxu0
        %v666 = vadd.f32 %v560, %v665
        %v667 = vpop.f32.mrb[0].mxu0
        %v668 = vpop.f32.mrb[0].mxu0
        %v669 = vadd.f32 %v560, %v668
        %v670 = vpop.f32.mrb[0].mxu0
        %671 = vmatprep.mubr.bf16.mxu0 0
        %672 = vmatmul.mubr.bf16.gmra.mrb[0].mxu0 %v591
        %v673 = vpop.f32.mrb[0].mxu0
        %v674 = vadd.f32 %v560, %v673
        %v675 = vpop.f32.mrb[0].mxu0
        %v676 = vpop.f32.mrb[0].mxu0
        %v677 = vadd.f32 %v560, %v676
        %v678 = vpop.f32.mrb[0].mxu0
        %679 = vmatprep.mubr.bf16.mxu0 0
        %680 = vmatmul.mubr.bf16.gmra.mrb[0].mxu0 %v594
        %v681 = vpop.f32.mrb[0].mxu0
        %v682 = vadd.f32 %v560, %v681
        %v683 = vpop.f32.mrb[0].mxu0
        %v684 = vpop.f32.mrb[0].mxu0
        %v685 = vadd.f32 %v560, %v684
        %v686 = vpop.f32.mrb[0].mxu0
        %687 = vmatprep.mubr.bf16.mxu0 0
        %688 = vmatmul.mubr.bf16.gmra.mrb[0].mxu0 %v597
        %v689 = vpop.f32.mrb[0].mxu0
        %v690 = vadd.f32 %v560, %v689
        %v691 = vpop.f32.mrb[0].mxu0
        %v692 = vpop.f32.mrb[0].mxu0
        %v693 = vadd.f32 %v560, %v692
        %v694 = vpop.f32.mrb[0].mxu0
        %695 = vdwg.mxu0
        %v696 = vmul.f32 %v634, 0.01
        %v697 = vmul.f32 %v637, 0.01
        %v698 = vmul.f32 %v642, 0.01
        %v699 = vmul.f32 %v645, 0.01
        %v700 = vmul.f32 %v650, 0.01
        %v701 = vmul.f32 %v653, 0.01
        %v702 = vmul.f32 %v658, 0.01
        %v703 = vmul.f32 %v661, 0.01
        %v704 = vmul.f32 %v666, 0.01
        %v705 = vmul.f32 %v669, 0.01
        %v706 = vmul.f32 %v674, 0.01
        %v707 = vmul.f32 %v677, 0.01
        %v708 = vmul.f32 %v682, 0.01
        %v709 = vmul.f32 %v685, 0.01
        %v710 = vmul.f32 %v690, 0.01
        %v711 = vmul.f32 %v693, 0.01
        %v712 = vmax.f32 %v634, %v696
        %v713 = vmax.f32 %v637, %v697
        %v714 = vmax.f32 %v642, %v698
        %v715 = vmax.f32 %v645, %v699
        %v716 = vmax.f32 %v650, %v700
        %v717 = vmax.f32 %v653, %v701
        %v718 = vmax.f32 %v658, %v702
        %v719 = vmax.f32 %v661, %v703
        %v720 = vmax.f32 %v666, %v704
        %v721 = vmax.f32 %v669, %v705
        %v722 = vmax.f32 %v674, %v706
        %v723 = vmax.f32 %v677, %v707
        %v724 = vmax.f32 %v682, %v708
        %v725 = vmax.f32 %v685, %v709
        %v726 = vmax.f32 %v690, %v710
        %v727 = vmax.f32 %v693, %v711
        %v728 = vpack.c.bf16 %v713, %v712
        %v729 = vpack.c.bf16 %v715, %v714
        %v730 = vpack.c.bf16 %v717, %v716
        %v731 = vpack.c.bf16 %v719, %v718
        %v732 = vpack.c.bf16 %v721, %v720
        %v733 = vpack.c.bf16 %v723, %v722
        %v734 = vpack.c.bf16 %v725, %v724
        %v735 = vpack.c.bf16 %v727, %v726
        %v736 = vld [vmem:[%s5] sm:$0xf]
        %v737 = vld [vmem:[%s5 + $0x4] sm:$0xf]
        %v738 = vld [vmem:[%s5 + $0x8] sm:$0xf]
        %v739 = vld [vmem:[%s5 + $0xc] sm:$0xf]
        %v740 = vld [vmem:[%s6] sm:$0x1]
        %v742 = vlaneseq
        %v743 = vshrl.u32 %v742, 7
        %v744 = vsub.s32 0, %v743
        %v745 = vrot.slane %v740, %v744
        %v751 = vunpack.c.l.b16 %v736
        %v752 = vunpack.c.l.b16 %v737
        %v753 = vunpack.c.l.b16 %v738
        %v754 = vunpack.c.l.b16 %v739
        %v755 = vpack.c.b16 %v752, %v751
        %v756 = vpack.c.b16 %v754, %v753
        %v760 = vsel %vm574, %v728, 0
        %v763 = vsel %vm574, %v729, 0
        %v766 = vsel %vm574, %v730, 0
        %v769 = vsel %vm574, %v731, 0
        %v772 = vsel %vm574, %v732, 0
        %v775 = vsel %vm574, %v733, 0
        %v778 = vsel %vm574, %v734, 0
        %v781 = vsel %vm574, %v735, 0
        %783 = vmatprep.subr.bf16.mxu0 0
        %784 = vmatpush1.bf16.msra.mxu0 %v755
        %785 = vmatprep.subr.bf16.mxu0 0
        %786 = vmatpush1.bf16.msra.mxu0 %v756
        %787 = vmatprep.subr.bf16.mxu0 0
        %788 = vmatpush1.bf16.msra.mxu0 0
        %789 = vmatprep.subr.bf16.mxu0 0
        %790 = vmatpush1.bf16.msra.mxu0 0
        %791 = vmatprep.subr.bf16.mxu0 0
        %792 = vmatpush1.bf16.msra.mxu0 0
        %793 = vmatprep.subr.bf16.mxu0 0
        %794 = vmatpush1.bf16.msra.mxu0 0
        %795 = vmatprep.subr.bf16.mxu0 0
        %796 = vmatpush1.bf16.msra.mxu0 0
        %797 = vmatprep.subr.bf16.mxu0 0
        %798 = vmatpush1.bf16.msra.mxu0 0
        %799 = vmatprep.subr.bf16.mxu0 0
        %800 = vmatpush1.bf16.msra.mxu0 0
        %801 = vmatprep.subr.bf16.mxu0 0
        %802 = vmatpush1.bf16.msra.mxu0 0
        %803 = vmatprep.subr.bf16.mxu0 0
        %804 = vmatpush1.bf16.msra.mxu0 0
        %805 = vmatprep.subr.bf16.mxu0 0
        %806 = vmatpush1.bf16.msra.mxu0 0
        %807 = vmatprep.subr.bf16.mxu0 0
        %808 = vmatpush1.bf16.msra.mxu0 0
        %809 = vmatprep.subr.bf16.mxu0 0
        %810 = vmatpush1.bf16.msra.mxu0 0
        %811 = vmatprep.subr.bf16.mxu0 0
        %812 = vmatpush1.bf16.msra.mxu0 0
        %813 = vmatprep.subr.bf16.mxu0 0
        %814 = vmatpush1.bf16.msra.mxu0 0
        %815 = vmatprep.mubr.bf16.mxu0 0
        %816 = vmatmul.mubr.bf16.gmra.mrb[0].mxu0 %v760
        %v817 = vpop.f32.mrb[0].mxu0
        %v818 = vadd.f32 %v745, %v817
        %v819 = vpop.f32.mrb[0].mxu0
        %v820 = vpop.f32.mrb[0].mxu0
        %v821 = vadd.f32 %v745, %v820
        %v822 = vpop.f32.mrb[0].mxu0
        %823 = vmatprep.mubr.bf16.mxu0 0
        %824 = vmatmul.mubr.bf16.gmra.mrb[0].mxu0 %v763
        %v825 = vpop.f32.mrb[0].mxu0
        %v826 = vadd.f32 %v745, %v825
        %v827 = vpop.f32.mrb[0].mxu0
        %v828 = vpop.f32.mrb[0].mxu0
        %v829 = vadd.f32 %v745, %v828
        %v830 = vpop.f32.mrb[0].mxu0
        %831 = vmatprep.mubr.bf16.mxu0 0
        %832 = vmatmul.mubr.bf16.gmra.mrb[0].mxu0 %v766
        %v833 = vpop.f32.mrb[0].mxu0
        %v834 = vadd.f32 %v745, %v833
        %v835 = vpop.f32.mrb[0].mxu0
        %v836 = vpop.f32.mrb[0].mxu0
        %v837 = vadd.f32 %v745, %v836
        %v838 = vpop.f32.mrb[0].mxu0
        %839 = vmatprep.mubr.bf16.mxu0 0
        %840 = vmatmul.mubr.bf16.gmra.mrb[0].mxu0 %v769
        %v841 = vpop.f32.mrb[0].mxu0
        %v842 = vadd.f32 %v745, %v841
        %v843 = vpop.f32.mrb[0].mxu0
        %v844 = vpop.f32.mrb[0].mxu0
        %v845 = vadd.f32 %v745, %v844
        %v846 = vpop.f32.mrb[0].mxu0
        %847 = vmatprep.mubr.bf16.mxu0 0
        %848 = vmatmul.mubr.bf16.gmra.mrb[0].mxu0 %v772
        %v849 = vpop.f32.mrb[0].mxu0
        %v850 = vadd.f32 %v745, %v849
        %v851 = vpop.f32.mrb[0].mxu0
        %v852 = vpop.f32.mrb[0].mxu0
        %v853 = vadd.f32 %v745, %v852
        %v854 = vpop.f32.mrb[0].mxu0
        %855 = vmatprep.mubr.bf16.mxu0 0
        %856 = vmatmul.mubr.bf16.gmra.mrb[0].mxu0 %v775
        %v857 = vpop.f32.mrb[0].mxu0
        %v858 = vadd.f32 %v745, %v857
        %v859 = vpop.f32.mrb[0].mxu0
        %v860 = vpop.f32.mrb[0].mxu0
        %v861 = vadd.f32 %v745, %v860
        %v862 = vpop.f32.mrb[0].mxu0
        %863 = vmatprep.mubr.bf16.mxu0 0
        %864 = vmatmul.mubr.bf16.gmra.mrb[0].mxu0 %v778
        %v865 = vpop.f32.mrb[0].mxu0
        %v866 = vadd.f32 %v745, %v865
        %v867 = vpop.f32.mrb[0].mxu0
        %v868 = vpop.f32.mrb[0].mxu0
        %v869 = vadd.f32 %v745, %v868
        %v870 = vpop.f32.mrb[0].mxu0
        %871 = vmatprep.mubr.bf16.mxu0 0
        %872 = vmatmul.mubr.bf16.gmra.mrb[0].mxu0 %v781
        %v873 = vpop.f32.mrb[0].mxu0
        %v874 = vadd.f32 %v745, %v873
        %v875 = vpop.f32.mrb[0].mxu0
        %v876 = vpop.f32.mrb[0].mxu0
        %v877 = vadd.f32 %v745, %v876
        %v878 = vpop.f32.mrb[0].mxu0
        %879 = vdwg.mxu0
        %v880 = vmul.f32 %v818, 0.01
        %v881 = vmul.f32 %v821, 0.01
        %v882 = vmul.f32 %v826, 0.01
        %v883 = vmul.f32 %v829, 0.01
        %v884 = vmul.f32 %v834, 0.01
        %v885 = vmul.f32 %v837, 0.01
        %v886 = vmul.f32 %v842, 0.01
        %v887 = vmul.f32 %v845, 0.01
        %v888 = vmul.f32 %v850, 0.01
        %v889 = vmul.f32 %v853, 0.01
        %v890 = vmul.f32 %v858, 0.01
        %v891 = vmul.f32 %v861, 0.01
        %v892 = vmul.f32 %v866, 0.01
        %v893 = vmul.f32 %v869, 0.01
        %v894 = vmul.f32 %v874, 0.01
        %v895 = vmul.f32 %v877, 0.01
        %v896 = vmax.f32 %v818, %v880
        %v897 = vmax.f32 %v821, %v881
        %v898 = vmax.f32 %v826, %v882
        %v899 = vmax.f32 %v829, %v883
        %v900 = vmax.f32 %v834, %v884
        %v901 = vmax.f32 %v837, %v885
        %v902 = vmax.f32 %v842, %v886
        %v903 = vmax.f32 %v845, %v887
        %v904 = vmax.f32 %v850, %v888
        %v905 = vmax.f32 %v853, %v889
        %v906 = vmax.f32 %v858, %v890
        %v907 = vmax.f32 %v861, %v891
        %v908 = vmax.f32 %v866, %v892
        %v909 = vmax.f32 %v869, %v893
        %v910 = vmax.f32 %v874, %v894
        %v911 = vmax.f32 %v877, %v895
        %v912 = vld [vmem:[%s7] sm:$0x1]
        %v914 = vlaneseq
        %v915 = vshrl.u32 %v914, 7
        %v916 = vsub.s32 0, %v915
        %v917 = vrot.slane %v912, %v916
        %v919 = vmul.f32 %v896, %v917
        %v920 = vmul.f32 %v897, %v917
        %v921 = vmul.f32 %v898, %v917
        %v922 = vmul.f32 %v899, %v917
        %v923 = vmul.f32 %v900, %v917
        %v924 = vmul.f32 %v901, %v917
        %v925 = vmul.f32 %v902, %v917
        %v926 = vmul.f32 %v903, %v917
        %v927 = vmul.f32 %v904, %v917
        %v928 = vmul.f32 %v905, %v917
        %v929 = vmul.f32 %v906, %v917
        %v930 = vmul.f32 %v907, %v917
        %v931 = vmul.f32 %v908, %v917
        %v932 = vmul.f32 %v909, %v917
        %v933 = vmul.f32 %v910, %v917
        %v934 = vmul.f32 %v911, %v917
        %vm935 = vcmask 130048
        %v936 = vsel %vm935, %v919, 0.0
        %937 = vadd.xlane.f32.xlu0 %v936
        %v938 = vpop.xlane.xlu0 %937
        %v939 = vsel %vm935, %v920, 0.0
        %940 = vadd.xlane.f32.xlu0 %v939
        %v941 = vpop.xlane.xlu0 %940
        %v942 = vsel %vm935, %v921, 0.0
        %943 = vadd.xlane.f32.xlu0 %v942
        %v944 = vpop.xlane.xlu0 %943
        %v945 = vsel %vm935, %v922, 0.0
        %946 = vadd.xlane.f32.xlu0 %v945
        %v947 = vpop.xlane.xlu0 %946
        %v948 = vsel %vm935, %v923, 0.0
        %949 = vadd.xlane.f32.xlu0 %v948
        %v950 = vpop.xlane.xlu0 %949
        %v951 = vsel %vm935, %v924, 0.0
        %952 = vadd.xlane.f32.xlu0 %v951
        %v953 = vpop.xlane.xlu0 %952
        %v954 = vsel %vm935, %v925, 0.0
        %955 = vadd.xlane.f32.xlu0 %v954
        %v956 = vpop.xlane.xlu0 %955
        %v957 = vsel %vm935, %v926, 0.0
        %958 = vadd.xlane.f32.xlu0 %v957
        %v959 = vpop.xlane.xlu0 %958
        %v960 = vsel %vm935, %v927, 0.0
        %961 = vadd.xlane.f32.xlu0 %v960
        %v962 = vpop.xlane.xlu0 %961
        %v963 = vsel %vm935, %v928, 0.0
        %964 = vadd.xlane.f32.xlu0 %v963
        %v965 = vpop.xlane.xlu0 %964
        %v966 = vsel %vm935, %v929, 0.0
        %967 = vadd.xlane.f32.xlu0 %v966
        %v968 = vpop.xlane.xlu0 %967
        %v969 = vsel %vm935, %v930, 0.0
        %970 = vadd.xlane.f32.xlu0 %v969
        %v971 = vpop.xlane.xlu0 %970
        %v972 = vsel %vm935, %v931, 0.0
        %973 = vadd.xlane.f32.xlu0 %v972
        %v974 = vpop.xlane.xlu0 %973
        %v975 = vsel %vm935, %v932, 0.0
        %976 = vadd.xlane.f32.xlu0 %v975
        %v977 = vpop.xlane.xlu0 %976
        %v978 = vsel %vm935, %v933, 0.0
        %979 = vadd.xlane.f32.xlu0 %v978
        %v980 = vpop.xlane.xlu0 %979
        %v981 = vsel %vm935, %v934, 0.0
        %982 = vadd.xlane.f32.xlu0 %v981
        %v983 = vpop.xlane.xlu0 %982
        %v984 = vld [vmem:[%s374] sm:$0xff]
        %v985 = vmul.f32 %v984, 1e+08
        %v987 = vlaneseq
        %v988 = vshrl.u32 %v987, 7
        %v989 = vsub.s32 0, %v988
        %v990 = vrot.slane %v985, %v989
        %992 = vbcast.lane.b32.xlu0 %v990, 256
        %v993 = vpop.permute.xlu0 %992
        %s995 = sor.u32 256, 8
        %996 = vbcast.lane.b32.xlu0 %v990, %s995
        %v997 = vpop.permute.xlu0 %996
        %v998 = vlaneseq
        %v999 = vshrl.u32 %v998, 7
        %v1000 = vsub.s32 1, %v999
        %v1001 = vrot.slane %v985, %v1000
        %1003 = vbcast.lane.b32.xlu0 %v1001, 256
        %v1004 = vpop.permute.xlu0 %1003
        %s1006 = sor.u32 256, 8
        %1007 = vbcast.lane.b32.xlu0 %v1001, %s1006
        %v1008 = vpop.permute.xlu0 %1007
        %v1009 = vlaneseq
        %v1010 = vshrl.u32 %v1009, 7
        %v1011 = vsub.s32 2, %v1010
        %v1012 = vrot.slane %v985, %v1011
        %1014 = vbcast.lane.b32.xlu0 %v1012, 256
        %v1015 = vpop.permute.xlu0 %1014
        %s1017 = sor.u32 256, 8
        %1018 = vbcast.lane.b32.xlu0 %v1012, %s1017
        %v1019 = vpop.permute.xlu0 %1018
        %v1020 = vlaneseq
        %v1021 = vshrl.u32 %v1020, 7
        %v1022 = vsub.s32 3, %v1021
        %v1023 = vrot.slane %v985, %v1022
        %1025 = vbcast.lane.b32.xlu0 %v1023, 256
        %v1026 = vpop.permute.xlu0 %1025
        %s1028 = sor.u32 256, 8
        %1029 = vbcast.lane.b32.xlu0 %v1023, %s1028
        %v1030 = vpop.permute.xlu0 %1029
        %v1031 = vlaneseq
        %v1032 = vshrl.u32 %v1031, 7
        %v1033 = vsub.s32 4, %v1032
        %v1034 = vrot.slane %v985, %v1033
        %1036 = vbcast.lane.b32.xlu0 %v1034, 256
        %v1037 = vpop.permute.xlu0 %1036
        %s1039 = sor.u32 256, 8
        %1040 = vbcast.lane.b32.xlu0 %v1034, %s1039
        %v1041 = vpop.permute.xlu0 %1040
        %v1042 = vlaneseq
        %v1043 = vshrl.u32 %v1042, 7
        %v1044 = vsub.s32 5, %v1043
        %v1045 = vrot.slane %v985, %v1044
        %1047 = vbcast.lane.b32.xlu0 %v1045, 256
        %v1048 = vpop.permute.xlu0 %1047
        %s1050 = sor.u32 256, 8
        %1051 = vbcast.lane.b32.xlu0 %v1045, %s1050
        %v1052 = vpop.permute.xlu0 %1051
        %v1053 = vlaneseq
        %v1054 = vshrl.u32 %v1053, 7
        %v1055 = vsub.s32 6, %v1054
        %v1056 = vrot.slane %v985, %v1055
        %1058 = vbcast.lane.b32.xlu0 %v1056, 256
        %v1059 = vpop.permute.xlu0 %1058
        %s1061 = sor.u32 256, 8
        %1062 = vbcast.lane.b32.xlu0 %v1056, %s1061
        %v1063 = vpop.permute.xlu0 %1062
        %v1064 = vlaneseq
        %v1065 = vshrl.u32 %v1064, 7
        %v1066 = vsub.s32 7, %v1065
        %v1067 = vrot.slane %v985, %v1066
        %1069 = vbcast.lane.b32.xlu0 %v1067, 256
        %v1070 = vpop.permute.xlu0 %1069
        %s1072 = sor.u32 256, 8
        %1073 = vbcast.lane.b32.xlu0 %v1067, %s1072
        %v1074 = vpop.permute.xlu0 %1073
        %v1091 = vsub.f32 %v938, %v993
        %v1092 = vsub.f32 %v941, %v997
        %v1093 = vsub.f32 %v944, %v1004
        %v1094 = vsub.f32 %v947, %v1008
        %v1095 = vsub.f32 %v950, %v1015
        %v1096 = vsub.f32 %v953, %v1019
        %v1097 = vsub.f32 %v956, %v1026
        %v1098 = vsub.f32 %v959, %v1030
        %v1099 = vsub.f32 %v962, %v1037
        %v1100 = vsub.f32 %v965, %v1041
        %v1101 = vsub.f32 %v968, %v1048
        %v1102 = vsub.f32 %v971, %v1052
        %v1103 = vsub.f32 %v974, %v1059
        %v1104 = vsub.f32 %v977, %v1063
        %v1105 = vsub.f32 %v980, %v1070
        %v1106 = vsub.f32 %v983, %v1074
        %1123 = vset.pattern.permute.xlu0 0
        %1124 = vperm.xlu0 %1123, %v1091
        %v1125 = vpop.permute.xlu0 %1124
        %1126 = vset.pattern.permute.xlu0 0
        %1127 = vperm.xlu0 %1126, %v1092
        %v1128 = vpop.permute.xlu0 %1127
        %1129 = vset.pattern.permute.xlu0 0
        %1130 = vperm.xlu0 %1129, %v1093
        %v1131 = vpop.permute.xlu0 %1130
        %1132 = vset.pattern.permute.xlu0 0
        %1133 = vperm.xlu0 %1132, %v1094
        %v1134 = vpop.permute.xlu0 %1133
        %1135 = vset.pattern.permute.xlu0 0
        %1136 = vperm.xlu0 %1135, %v1095
        %v1137 = vpop.permute.xlu0 %1136
        %1138 = vset.pattern.permute.xlu0 0
        %1139 = vperm.xlu0 %1138, %v1096
        %v1140 = vpop.permute.xlu0 %1139
        %1141 = vset.pattern.permute.xlu0 0
        %1142 = vperm.xlu0 %1141, %v1097
        %v1143 = vpop.permute.xlu0 %1142
        %1144 = vset.pattern.permute.xlu0 0
        %1145 = vperm.xlu0 %1144, %v1098
        %v1146 = vpop.permute.xlu0 %1145
        %1147 = vset.pattern.permute.xlu0 0
        %1148 = vperm.xlu0 %1147, %v1099
        %v1149 = vpop.permute.xlu0 %1148
        %1150 = vset.pattern.permute.xlu0 0
        %1151 = vperm.xlu0 %1150, %v1100
        %v1152 = vpop.permute.xlu0 %1151
        %1153 = vset.pattern.permute.xlu0 0
        %1154 = vperm.xlu0 %1153, %v1101
        %v1155 = vpop.permute.xlu0 %1154
        %1156 = vset.pattern.permute.xlu0 0
        %1157 = vperm.xlu0 %1156, %v1102
        %v1158 = vpop.permute.xlu0 %1157
        %1159 = vset.pattern.permute.xlu0 0
        %1160 = vperm.xlu0 %1159, %v1103
        %v1161 = vpop.permute.xlu0 %1160
        %1162 = vset.pattern.permute.xlu0 0
        %1163 = vperm.xlu0 %1162, %v1104
        %v1164 = vpop.permute.xlu0 %1163
        %1165 = vset.pattern.permute.xlu0 0
        %1166 = vperm.xlu0 %1165, %v1105
        %v1167 = vpop.permute.xlu0 %1166
        %1168 = vset.pattern.permute.xlu0 0
        %1169 = vperm.xlu0 %1168, %v1106
        %v1170 = vpop.permute.xlu0 %1169
        %v1171 = vlaneseq
        %v1172 = vand.u32 %v1171, 127
        %v1173 = vlaneseq
        %v1174 = vshrl.u32 %v1173, 7
        %v1175 = vsub.s32 %v1172, %v1174
        %v1176 = vrot.slane %v1125, %v1175
        %v1177 = vadd.s32 %v1172, 4294967288
        %v1178 = vlaneseq
        %v1179 = vshrl.u32 %v1178, 7
        %v1180 = vsub.s32 %v1177, %v1179
        %v1181 = vrot.slane %v1128, %v1180
        %vm1182 = vcmask 130112
        %v1183 = vsel %vm1182, %v1181, %v1176
        %v1184 = vlaneseq
        %v1185 = vshrl.u32 %v1184, 7
        %v1186 = vsub.s32 %v1172, %v1185
        %v1187 = vrot.slane %v1131, %v1186
        %v1188 = vlaneseq
        %v1189 = vshrl.u32 %v1188, 7
        %v1190 = vsub.s32 %v1177, %v1189
        %v1191 = vrot.slane %v1134, %v1190
        %v1192 = vsel %vm1182, %v1191, %v1187
        %v1193 = vlaneseq
        %v1194 = vshrl.u32 %v1193, 7
        %v1195 = vsub.s32 %v1172, %v1194
        %v1196 = vrot.slane %v1137, %v1195
        %v1197 = vlaneseq
        %v1198 = vshrl.u32 %v1197, 7
        %v1199 = vsub.s32 %v1177, %v1198
        %v1200 = vrot.slane %v1140, %v1199
        %v1201 = vsel %vm1182, %v1200, %v1196
        %v1202 = vlaneseq
        %v1203 = vshrl.u32 %v1202, 7
        %v1204 = vsub.s32 %v1172, %v1203
        %v1205 = vrot.slane %v1143, %v1204
        %v1206 = vlaneseq
        %v1207 = vshrl.u32 %v1206, 7
        %v1208 = vsub.s32 %v1177, %v1207
        %v1209 = vrot.slane %v1146, %v1208
        %v1210 = vsel %vm1182, %v1209, %v1205
        %v1211 = vlaneseq
        %v1212 = vshrl.u32 %v1211, 7
        %v1213 = vsub.s32 %v1172, %v1212
        %v1214 = vrot.slane %v1149, %v1213
        %v1215 = vlaneseq
        %v1216 = vshrl.u32 %v1215, 7
        %v1217 = vsub.s32 %v1177, %v1216
        %v1218 = vrot.slane %v1152, %v1217
        %v1219 = vsel %vm1182, %v1218, %v1214
        %v1220 = vlaneseq
        %v1221 = vshrl.u32 %v1220, 7
        %v1222 = vsub.s32 %v1172, %v1221
        %v1223 = vrot.slane %v1155, %v1222
        %v1224 = vlaneseq
        %v1225 = vshrl.u32 %v1224, 7
        %v1226 = vsub.s32 %v1177, %v1225
        %v1227 = vrot.slane %v1158, %v1226
        %v1228 = vsel %vm1182, %v1227, %v1223
        %v1229 = vlaneseq
        %v1230 = vshrl.u32 %v1229, 7
        %v1231 = vsub.s32 %v1172, %v1230
        %v1232 = vrot.slane %v1161, %v1231
        %v1233 = vlaneseq
        %v1234 = vshrl.u32 %v1233, 7
        %v1235 = vsub.s32 %v1177, %v1234
        %v1236 = vrot.slane %v1164, %v1235
        %v1237 = vsel %vm1182, %v1236, %v1232
        %v1238 = vlaneseq
        %v1239 = vshrl.u32 %v1238, 7
        %v1240 = vsub.s32 %v1172, %v1239
        %v1241 = vrot.slane %v1167, %v1240
        %v1242 = vlaneseq
        %v1243 = vshrl.u32 %v1242, 7
        %v1244 = vsub.s32 %v1177, %v1243
        %v1245 = vrot.slane %v1170, %v1244
        %v1246 = vsel %vm1182, %v1245, %v1241
        %vm1247 = vcmask 1041409
        %v1248 = vsel %vm1247, %v1192, %v1183
        %vm1249 = vcmask 1042434
        %v1250 = vsel %vm1249, %v1201, %v1248
        %vm1251 = vcmask 1043459
        %v1252 = vsel %vm1251, %v1210, %v1250
        %vm1253 = vcmask 1044484
        %v1254 = vsel %vm1253, %v1219, %v1252
        %vm1255 = vcmask 1045509
        %v1256 = vsel %vm1255, %v1228, %v1254
        %vm1257 = vcmask 1046534
        %v1258 = vsel %vm1257, %v1237, %v1256
        %vm1259 = vcmask 1047559
        %v1260 = vsel %vm1259, %v1246, %v1258
        %v1262 = vsel %vm935, %v1260, -inf
        %1263 = vmax.xlane.f32.xlu0 %v1262
        %v1264 = vpop.xlane.xlu0 %1263
        %v1266 = vlaneseq
        %v1267 = vshrl.u32 %v1266, 7
        %v1268 = vsub.s32 0, %v1267
        %v1269 = vrot.slane %v1264, %v1268
        %v1270 = vlaneseq
        %v1271 = vshrl.u32 %v1270, 7
        %v1272 = vsub.s32 1, %v1271
        %v1273 = vrot.slane %v1264, %v1272
        %v1274 = vlaneseq
        %v1275 = vshrl.u32 %v1274, 7
        %v1276 = vsub.s32 2, %v1275
        %v1277 = vrot.slane %v1264, %v1276
        %v1278 = vlaneseq
        %v1279 = vshrl.u32 %v1278, 7
        %v1280 = vsub.s32 3, %v1279
        %v1281 = vrot.slane %v1264, %v1280
        %v1282 = vlaneseq
        %v1283 = vshrl.u32 %v1282, 7
        %v1284 = vsub.s32 4, %v1283
        %v1285 = vrot.slane %v1264, %v1284
        %v1286 = vlaneseq
        %v1287 = vshrl.u32 %v1286, 7
        %v1288 = vsub.s32 5, %v1287
        %v1289 = vrot.slane %v1264, %v1288
        %v1290 = vlaneseq
        %v1291 = vshrl.u32 %v1290, 7
        %v1292 = vsub.s32 6, %v1291
        %v1293 = vrot.slane %v1264, %v1292
        %v1294 = vlaneseq
        %v1295 = vshrl.u32 %v1294, 7
        %v1296 = vsub.s32 7, %v1295
        %v1297 = vrot.slane %v1264, %v1296
        %v1306 = vsub.f32 %v1091, %v1269
        %v1307 = vsub.f32 %v1092, %v1269
        %v1308 = vsub.f32 %v1093, %v1273
        %v1309 = vsub.f32 %v1094, %v1273
        %v1310 = vsub.f32 %v1095, %v1277
        %v1311 = vsub.f32 %v1096, %v1277
        %v1312 = vsub.f32 %v1097, %v1281
        %v1313 = vsub.f32 %v1098, %v1281
        %v1314 = vsub.f32 %v1099, %v1285
        %v1315 = vsub.f32 %v1100, %v1285
        %v1316 = vsub.f32 %v1101, %v1289
        %v1317 = vsub.f32 %v1102, %v1289
        %v1318 = vsub.f32 %v1103, %v1293
        %v1319 = vsub.f32 %v1104, %v1293
        %v1320 = vsub.f32 %v1105, %v1297
        %v1321 = vsub.f32 %v1106, %v1297
        %v1322 = vmul.f32 %v1306, 1.442695
        %v1323 = vpow.pop %v1322
        %v1324 = vmul.f32 %v1307, 1.442695
        %v1325 = vpow.pop %v1324
        %v1326 = vmul.f32 %v1308, 1.442695
        %v1327 = vpow.pop %v1326
        %v1328 = vmul.f32 %v1309, 1.442695
        %v1329 = vpow.pop %v1328
        %v1330 = vmul.f32 %v1310, 1.442695
        %v1331 = vpow.pop %v1330
        %v1332 = vmul.f32 %v1311, 1.442695
        %v1333 = vpow.pop %v1332
        %v1334 = vmul.f32 %v1312, 1.442695
        %v1335 = vpow.pop %v1334
        %v1336 = vmul.f32 %v1313, 1.442695
        %v1337 = vpow.pop %v1336
        %v1338 = vmul.f32 %v1314, 1.442695
        %v1339 = vpow.pop %v1338
        %v1340 = vmul.f32 %v1315, 1.442695
        %v1341 = vpow.pop %v1340
        %v1342 = vmul.f32 %v1316, 1.442695
        %v1343 = vpow.pop %v1342
        %v1344 = vmul.f32 %v1317, 1.442695
        %v1345 = vpow.pop %v1344
        %v1346 = vmul.f32 %v1318, 1.442695
        %v1347 = vpow.pop %v1346
        %v1348 = vmul.f32 %v1319, 1.442695
        %v1349 = vpow.pop %v1348
        %v1350 = vmul.f32 %v1320, 1.442695
        %v1351 = vpow.pop %v1350
        %v1352 = vmul.f32 %v1321, 1.442695
        %v1353 = vpow.pop %v1352
        %1370 = vset.pattern.permute.xlu0 0
        %1371 = vperm.xlu0 %1370, %v1323
        %v1372 = vpop.permute.xlu0 %1371
        %1373 = vset.pattern.permute.xlu0 0
        %1374 = vperm.xlu0 %1373, %v1325
        %v1375 = vpop.permute.xlu0 %1374
        %1376 = vset.pattern.permute.xlu0 0
        %1377 = vperm.xlu0 %1376, %v1327
        %v1378 = vpop.permute.xlu0 %1377
        %1379 = vset.pattern.permute.xlu0 0
        %1380 = vperm.xlu0 %1379, %v1329
        %v1381 = vpop.permute.xlu0 %1380
        %1382 = vset.pattern.permute.xlu0 0
        %1383 = vperm.xlu0 %1382, %v1331
        %v1384 = vpop.permute.xlu0 %1383
        %1385 = vset.pattern.permute.xlu0 0
        %1386 = vperm.xlu0 %1385, %v1333
        %v1387 = vpop.permute.xlu0 %1386
        %1388 = vset.pattern.permute.xlu0 0
        %1389 = vperm.xlu0 %1388, %v1335
        %v1390 = vpop.permute.xlu0 %1389
        %1391 = vset.pattern.permute.xlu0 0
        %1392 = vperm.xlu0 %1391, %v1337
        %v1393 = vpop.permute.xlu0 %1392
        %1394 = vset.pattern.permute.xlu0 0
        %1395 = vperm.xlu0 %1394, %v1339
        %v1396 = vpop.permute.xlu0 %1395
        %1397 = vset.pattern.permute.xlu0 0
        %1398 = vperm.xlu0 %1397, %v1341
        %v1399 = vpop.permute.xlu0 %1398
        %1400 = vset.pattern.permute.xlu0 0
        %1401 = vperm.xlu0 %1400, %v1343
        %v1402 = vpop.permute.xlu0 %1401
        %1403 = vset.pattern.permute.xlu0 0
        %1404 = vperm.xlu0 %1403, %v1345
        %v1405 = vpop.permute.xlu0 %1404
        %1406 = vset.pattern.permute.xlu0 0
        %1407 = vperm.xlu0 %1406, %v1347
        %v1408 = vpop.permute.xlu0 %1407
        %1409 = vset.pattern.permute.xlu0 0
        %1410 = vperm.xlu0 %1409, %v1349
        %v1411 = vpop.permute.xlu0 %1410
        %1412 = vset.pattern.permute.xlu0 0
        %1413 = vperm.xlu0 %1412, %v1351
        %v1414 = vpop.permute.xlu0 %1413
        %1415 = vset.pattern.permute.xlu0 0
        %1416 = vperm.xlu0 %1415, %v1353
        %v1417 = vpop.permute.xlu0 %1416
        %v1418 = vlaneseq
        %v1419 = vshrl.u32 %v1418, 7
        %v1420 = vsub.s32 %v1172, %v1419
        %v1421 = vrot.slane %v1372, %v1420
        %v1422 = vlaneseq
        %v1423 = vshrl.u32 %v1422, 7
        %v1424 = vsub.s32 %v1177, %v1423
        %v1425 = vrot.slane %v1375, %v1424
        %v1426 = vsel %vm1182, %v1425, %v1421
        %v1427 = vlaneseq
        %v1428 = vshrl.u32 %v1427, 7
        %v1429 = vsub.s32 %v1172, %v1428
        %v1430 = vrot.slane %v1378, %v1429
        %v1431 = vlaneseq
        %v1432 = vshrl.u32 %v1431, 7
        %v1433 = vsub.s32 %v1177, %v1432
        %v1434 = vrot.slane %v1381, %v1433
        %v1435 = vsel %vm1182, %v1434, %v1430
        %v1436 = vlaneseq
        %v1437 = vshrl.u32 %v1436, 7
        %v1438 = vsub.s32 %v1172, %v1437
        %v1439 = vrot.slane %v1384, %v1438
        %v1440 = vlaneseq
        %v1441 = vshrl.u32 %v1440, 7
        %v1442 = vsub.s32 %v1177, %v1441
        %v1443 = vrot.slane %v1387, %v1442
        %v1444 = vsel %vm1182, %v1443, %v1439
        %v1445 = vlaneseq
        %v1446 = vshrl.u32 %v1445, 7
        %v1447 = vsub.s32 %v1172, %v1446
        %v1448 = vrot.slane %v1390, %v1447
        %v1449 = vlaneseq
        %v1450 = vshrl.u32 %v1449, 7
        %v1451 = vsub.s32 %v1177, %v1450
        %v1452 = vrot.slane %v1393, %v1451
        %v1453 = vsel %vm1182, %v1452, %v1448
        %v1454 = vlaneseq
        %v1455 = vshrl.u32 %v1454, 7
        %v1456 = vsub.s32 %v1172, %v1455
        %v1457 = vrot.slane %v1396, %v1456
        %v1458 = vlaneseq
        %v1459 = vshrl.u32 %v1458, 7
        %v1460 = vsub.s32 %v1177, %v1459
        %v1461 = vrot.slane %v1399, %v1460
        %v1462 = vsel %vm1182, %v1461, %v1457
        %v1463 = vlaneseq
        %v1464 = vshrl.u32 %v1463, 7
        %v1465 = vsub.s32 %v1172, %v1464
        %v1466 = vrot.slane %v1402, %v1465
        %v1467 = vlaneseq
        %v1468 = vshrl.u32 %v1467, 7
        %v1469 = vsub.s32 %v1177, %v1468
        %v1470 = vrot.slane %v1405, %v1469
        %v1471 = vsel %vm1182, %v1470, %v1466
        %v1472 = vlaneseq
        %v1473 = vshrl.u32 %v1472, 7
        %v1474 = vsub.s32 %v1172, %v1473
        %v1475 = vrot.slane %v1408, %v1474
        %v1476 = vlaneseq
        %v1477 = vshrl.u32 %v1476, 7
        %v1478 = vsub.s32 %v1177, %v1477
        %v1479 = vrot.slane %v1411, %v1478
        %v1480 = vsel %vm1182, %v1479, %v1475
        %v1481 = vlaneseq
        %v1482 = vshrl.u32 %v1481, 7
        %v1483 = vsub.s32 %v1172, %v1482
        %v1484 = vrot.slane %v1414, %v1483
        %v1485 = vlaneseq
        %v1486 = vshrl.u32 %v1485, 7
        %v1487 = vsub.s32 %v1177, %v1486
        %v1488 = vrot.slane %v1417, %v1487
        %v1489 = vsel %vm1182, %v1488, %v1484
        %v1490 = vsel %vm1247, %v1435, %v1426
        %v1491 = vsel %vm1249, %v1444, %v1490
        %v1492 = vsel %vm1251, %v1453, %v1491
        %v1493 = vsel %vm1253, %v1462, %v1492
        %v1494 = vsel %vm1255, %v1471, %v1493
        %v1495 = vsel %vm1257, %v1480, %v1494
        %v1496 = vsel %vm1259, %v1489, %v1495
        %v1498 = vsel %vm935, %v1496, 0.0
        %1499 = vadd.xlane.f32.xlu0 %v1498
        %v1500 = vpop.xlane.xlu0 %1499
        %v1502 = vlaneseq
        %v1503 = vshrl.u32 %v1502, 7
        %v1504 = vsub.s32 0, %v1503
        %v1505 = vrot.slane %v1500, %v1504
        %v1506 = vlaneseq
        %v1507 = vshrl.u32 %v1506, 7
        %v1508 = vsub.s32 1, %v1507
        %v1509 = vrot.slane %v1500, %v1508
        %v1510 = vlaneseq
        %v1511 = vshrl.u32 %v1510, 7
        %v1512 = vsub.s32 2, %v1511
        %v1513 = vrot.slane %v1500, %v1512
        %v1514 = vlaneseq
        %v1515 = vshrl.u32 %v1514, 7
        %v1516 = vsub.s32 3, %v1515
        %v1517 = vrot.slane %v1500, %v1516
        %v1518 = vlaneseq
        %v1519 = vshrl.u32 %v1518, 7
        %v1520 = vsub.s32 4, %v1519
        %v1521 = vrot.slane %v1500, %v1520
        %v1522 = vlaneseq
        %v1523 = vshrl.u32 %v1522, 7
        %v1524 = vsub.s32 5, %v1523
        %v1525 = vrot.slane %v1500, %v1524
        %v1526 = vlaneseq
        %v1527 = vshrl.u32 %v1526, 7
        %v1528 = vsub.s32 6, %v1527
        %v1529 = vrot.slane %v1500, %v1528
        %v1530 = vlaneseq
        %v1531 = vshrl.u32 %v1530, 7
        %v1532 = vsub.s32 7, %v1531
        %v1533 = vrot.slane %v1500, %v1532
        %v1542 = vrcp.pop %v1505
        %v1543 = vmul.f32 %v1323, %v1542
        %v1544 = vmul.f32 %v1325, %v1542
        %v1545 = vrcp.pop %v1509
        %v1546 = vmul.f32 %v1327, %v1545
        %v1547 = vmul.f32 %v1329, %v1545
        %v1548 = vrcp.pop %v1513
        %v1549 = vmul.f32 %v1331, %v1548
        %v1550 = vmul.f32 %v1333, %v1548
        %v1551 = vrcp.pop %v1517
        %v1552 = vmul.f32 %v1335, %v1551
        %v1553 = vmul.f32 %v1337, %v1551
        %v1554 = vrcp.pop %v1521
        %v1555 = vmul.f32 %v1339, %v1554
        %v1556 = vmul.f32 %v1341, %v1554
        %v1557 = vrcp.pop %v1525
        %v1558 = vmul.f32 %v1343, %v1557
        %v1559 = vmul.f32 %v1345, %v1557
        %v1560 = vrcp.pop %v1529
        %v1561 = vmul.f32 %v1347, %v1560
        %v1562 = vmul.f32 %v1349, %v1560
        %v1563 = vrcp.pop %v1533
        %v1564 = vmul.f32 %v1351, %v1563
        %v1565 = vmul.f32 %v1353, %v1563
        %1582 = vset.pattern.permute.xlu0 0
        %1583 = vperm.xlu0 %1582, %v1543
        %v1584 = vpop.permute.xlu0 %1583
        %1585 = vset.pattern.permute.xlu0 0
        %1586 = vperm.xlu0 %1585, %v1544
        %v1587 = vpop.permute.xlu0 %1586
        %1588 = vset.pattern.permute.xlu0 0
        %1589 = vperm.xlu0 %1588, %v1546
        %v1590 = vpop.permute.xlu0 %1589
        %1591 = vset.pattern.permute.xlu0 0
        %1592 = vperm.xlu0 %1591, %v1547
        %v1593 = vpop.permute.xlu0 %1592
        %1594 = vset.pattern.permute.xlu0 0
        %1595 = vperm.xlu0 %1594, %v1549
        %v1596 = vpop.permute.xlu0 %1595
        %1597 = vset.pattern.permute.xlu0 0
        %1598 = vperm.xlu0 %1597, %v1550
        %v1599 = vpop.permute.xlu0 %1598
        %1600 = vset.pattern.permute.xlu0 0
        %1601 = vperm.xlu0 %1600, %v1552
        %v1602 = vpop.permute.xlu0 %1601
        %1603 = vset.pattern.permute.xlu0 0
        %1604 = vperm.xlu0 %1603, %v1553
        %v1605 = vpop.permute.xlu0 %1604
        %1606 = vset.pattern.permute.xlu0 0
        %1607 = vperm.xlu0 %1606, %v1555
        %v1608 = vpop.permute.xlu0 %1607
        %1609 = vset.pattern.permute.xlu0 0
        %1610 = vperm.xlu0 %1609, %v1556
        %v1611 = vpop.permute.xlu0 %1610
        %1612 = vset.pattern.permute.xlu0 0
        %1613 = vperm.xlu0 %1612, %v1558
        %v1614 = vpop.permute.xlu0 %1613
        %1615 = vset.pattern.permute.xlu0 0
        %1616 = vperm.xlu0 %1615, %v1559
        %v1617 = vpop.permute.xlu0 %1616
        %1618 = vset.pattern.permute.xlu0 0
        %1619 = vperm.xlu0 %1618, %v1561
        %v1620 = vpop.permute.xlu0 %1619
        %1621 = vset.pattern.permute.xlu0 0
        %1622 = vperm.xlu0 %1621, %v1562
        %v1623 = vpop.permute.xlu0 %1622
        %1624 = vset.pattern.permute.xlu0 0
        %1625 = vperm.xlu0 %1624, %v1564
        %v1626 = vpop.permute.xlu0 %1625
        %1627 = vset.pattern.permute.xlu0 0
        %1628 = vperm.xlu0 %1627, %v1565
        %v1629 = vpop.permute.xlu0 %1628
        %v1630 = vlaneseq
        %v1631 = vshrl.u32 %v1630, 7
        %v1632 = vsub.s32 %v1172, %v1631
        %v1633 = vrot.slane %v1584, %v1632
        %v1634 = vlaneseq
        %v1635 = vshrl.u32 %v1634, 7
        %v1636 = vsub.s32 %v1177, %v1635
        %v1637 = vrot.slane %v1587, %v1636
        %v1638 = vsel %vm1182, %v1637, %v1633
        %v1639 = vlaneseq
        %v1640 = vshrl.u32 %v1639, 7
        %v1641 = vsub.s32 %v1172, %v1640
        %v1642 = vrot.slane %v1590, %v1641
        %v1643 = vlaneseq
        %v1644 = vshrl.u32 %v1643, 7
        %v1645 = vsub.s32 %v1177, %v1644
        %v1646 = vrot.slane %v1593, %v1645
        %v1647 = vsel %vm1182, %v1646, %v1642
        %v1648 = vlaneseq
        %v1649 = vshrl.u32 %v1648, 7
        %v1650 = vsub.s32 %v1172, %v1649
        %v1651 = vrot.slane %v1596, %v1650
        %v1652 = vlaneseq
        %v1653 = vshrl.u32 %v1652, 7
        %v1654 = vsub.s32 %v1177, %v1653
        %v1655 = vrot.slane %v1599, %v1654
        %v1656 = vsel %vm1182, %v1655, %v1651
        %v1657 = vlaneseq
        %v1658 = vshrl.u32 %v1657, 7
        %v1659 = vsub.s32 %v1172, %v1658
        %v1660 = vrot.slane %v1602, %v1659
        %v1661 = vlaneseq
        %v1662 = vshrl.u32 %v1661, 7
        %v1663 = vsub.s32 %v1177, %v1662
        %v1664 = vrot.slane %v1605, %v1663
        %v1665 = vsel %vm1182, %v1664, %v1660
        %v1666 = vlaneseq
        %v1667 = vshrl.u32 %v1666, 7
        %v1668 = vsub.s32 %v1172, %v1667
        %v1669 = vrot.slane %v1608, %v1668
        %v1670 = vlaneseq
        %v1671 = vshrl.u32 %v1670, 7
        %v1672 = vsub.s32 %v1177, %v1671
        %v1673 = vrot.slane %v1611, %v1672
        %v1674 = vsel %vm1182, %v1673, %v1669
        %v1675 = vlaneseq
        %v1676 = vshrl.u32 %v1675, 7
        %v1677 = vsub.s32 %v1172, %v1676
        %v1678 = vrot.slane %v1614, %v1677
        %v1679 = vlaneseq
        %v1680 = vshrl.u32 %v1679, 7
        %v1681 = vsub.s32 %v1177, %v1680
        %v1682 = vrot.slane %v1617, %v1681
        %v1683 = vsel %vm1182, %v1682, %v1678
        %v1684 = vlaneseq
        %v1685 = vshrl.u32 %v1684, 7
        %v1686 = vsub.s32 %v1172, %v1685
        %v1687 = vrot.slane %v1620, %v1686
        %v1688 = vlaneseq
        %v1689 = vshrl.u32 %v1688, 7
        %v1690 = vsub.s32 %v1177, %v1689
        %v1691 = vrot.slane %v1623, %v1690
        %v1692 = vsel %vm1182, %v1691, %v1687
        %v1693 = vlaneseq
        %v1694 = vshrl.u32 %v1693, 7
        %v1695 = vsub.s32 %v1172, %v1694
        %v1696 = vrot.slane %v1626, %v1695
        %v1697 = vlaneseq
        %v1698 = vshrl.u32 %v1697, 7
        %v1699 = vsub.s32 %v1177, %v1698
        %v1700 = vrot.slane %v1629, %v1699
        %v1701 = vsel %vm1182, %v1700, %v1696
        %v1702 = vsel %vm1247, %v1647, %v1638
        %v1703 = vsel %vm1249, %v1656, %v1702
        %v1704 = vsel %vm1251, %v1665, %v1703
        %v1705 = vsel %vm1253, %v1674, %v1704
        %v1706 = vsel %vm1255, %v1683, %v1705
        %v1707 = vsel %vm1257, %v1692, %v1706
        %v1708 = vsel %vm1259, %v1701, %v1707
        %1710 = vst.msk [vmem:[%s416] sm:$0xff] %vm935, %v1708
        %s1711 = sand.u32 %s237, 1
        %s1712 = scalar_lea.sflag [#allocation4], %s1711
        %s1713 = sand.u32 %s237, 1
        %s1714 = smul.addr %s1713, 8
        %s1715 = scalar_lea.vmem [#allocation8], %s1714
        // Predicated region
        $region65: #{tpu_custom_call.1} parent=51 // pred_check
          %p1716 = pneg %p247
        $region66: #{tpu_custom_call.1} parent=51 // pred_check_branch
          %1718 = sbr.rel (%p1716) target = $region68
        $region67: #{tpu_custom_call.1} parent=51 // pred_region
          %s1720 = ssub.s32 128, 128
          %1721 = vsyncadd %s1712, %s1720
          %s1722 = smul.addr %s32, 2
          %s1723 = sadd.s32 %s33, %s1722
          %s1724 = smul.addr %s1723, 128
          %s1725 = scalar_lea.hbm %s8, %s1724
          %s1727 = sshll.u32 %s1715, 4
          %s1728 = int_to_ptr.vmem [resolvable:$true] %s1727
          %1730 = dma.vmem_to_hbm [thread:$0]  %s1728, 128, %s1725, %s1712
        $region68: #{tpu_custom_call.1} parent=51 // pred_fallthru
          _
      $region52: #{tpu_custom_call.1} parent=5 // pred_fallthru
        _
      %p1731 = scmp.le.s32.totalorder 2, %s23
      // Predicated region
      $region69: #{tpu_custom_call.1} parent=5 // pred_check
        %p1732 = pneg %p1731
      $region70: #{tpu_custom_call.1} parent=5 // pred_check_branch
        %1734 = sbr.rel (%p1732) target = $region72
      $region71: #{tpu_custom_call.1} parent=5 // pred_region
        %s1735 = ssub.s32 %s23, 2
        // Predicated region
        $region73: #{tpu_custom_call.1} parent=71 // pred_check
          %p1736 = pneg %p253
        $region74: #{tpu_custom_call.1} parent=71 // pred_check_branch
          %1738 = sbr.rel (%p1736) target = $region76
        $region75: #{tpu_custom_call.1} parent=71 // pred_region
          %s1739 = sand.u32 %s238, 1
          %s1740 = scalar_lea.sflag [#allocation4], %s1739
          %s1741 = sand.u32 %s238, 1
          %s1742 = smul.addr %s1741, 8
          %s1743 = scalar_lea.vmem [#allocation8], %s1742
          %1744 = dma.done %s1740, 128
        $region76: #{tpu_custom_call.1} parent=71 // pred_fallthru
          _
      $region72: #{tpu_custom_call.1} parent=5 // pred_fallthru
        _
    $region6: #{tpu_custom_call.1} parent=1 // loop_footer
      %s27 = sadd.s32 1, %s23
    $region7: #{tpu_custom_call.1} parent=1 // loop_footer_branch
      %22 = sbr.rel target = $region3
    $region8: #{tpu_custom_call.1} parent=1 // loop_exit
      _
    %1745 = vsyncpa [#allocation3], 1
    %s1746 = scalar_lea.sflag [#allocation3], 1
    %1747 = vsyncpa %s1746, 1
    %1748 = vsyncpa [#allocation6], 1
    %s1749 = scalar_lea.sflag [#allocation6], 1
    %1750 = vsyncpa %s1749, 1
    %1751 = vsyncpa [#allocation4], 1
    %s1752 = scalar_lea.sflag [#allocation4], 1
    %1753 = vsyncpa %s1752, 1

</llo_original>
